<compile_context>
chip_gen: v7x
topology: tpu7x:2x2x1
jax: 0.10.0
libtpu: 0.0.40
codegen_flags: <defaults>
</compile_context>

<pallas_src>
import jax
import jax.numpy as jnp
import numpy as np
from jax.experimental import pallas as pl
from jax.experimental.pallas import tpu as pltpu


def _se_kernel(x_ref, w1_ref, b1_ref, w2_ref, b2_ref,
               fold_ref, wf1_ref, bf1_ref, wf2_ref, bf2_ref,
               out_ref, pad0_ref, pad1_ref):
    """One block of Bb batch elements per grid step.

    x_ref    : (Bb, H, W*C)       fused-layout input block
    w1/w2    : (3, W*C, W*C)      banded conv weights (one matrix per kernel row dy)
    b1/b2    : (1, W*C)           conv biases tiled along W
    fold     : (W*C, C)           W-fold matrix (stacked identities) for the global avg pool
    wf1/bf1  : (C, Ch), (1, Ch)   SE linear 1
    wf2/bf2  : (Ch, W*C), (1, W*C) SE linear 2, pre-tiled along W
    out_ref  : (Bb, H, W*C)       lane-dense output block
    pad0/1   : (Bb, H+2, W*C)     VMEM scratch: H-padded conv inputs
    """
    Bb, H, WC = x_ref.shape
    C = fold_ref.shape[1]
    inv_hw = 1.0 / float(H * (WC // C))

    x = x_ref[...]                                     # loaded once; reused for skip + residual
    zrow = jnp.zeros((Bb, 1, WC), jnp.float32)

    # ---- RB conv1: 3 row-shifted whole-block matmuls + bias + ReLU ----------
    pad0_ref[:, 0:1, :] = zrow                         # H halo (W halo is inside the band weights)
    pad0_ref[:, H + 1:H + 2, :] = zrow
    pad0_ref[:, 1:H + 1, :] = x

    acc = jnp.zeros((Bb * H, WC), jnp.float32)
    for dy in range(3):
        lhs = pad0_ref[:, dy:dy + H, :].reshape(Bb * H, WC)
        acc += jnp.dot(lhs, w1_ref[dy], preferred_element_type=jnp.float32)
    h1 = jnp.maximum(acc + b1_ref[...], 0.0)           # (Bb*H, WC)

    # ---- RB conv2 + bias + identity skip + ReLU -----------------------------
    pad1_ref[:, 0:1, :] = zrow
    pad1_ref[:, H + 1:H + 2, :] = zrow
    pad1_ref[:, 1:H + 1, :] = h1.reshape(Bb, H, WC)

    acc2 = jnp.zeros((Bb * H, WC), jnp.float32)
    for dy in range(3):
        lhs = pad1_ref[:, dy:dy + H, :].reshape(Bb * H, WC)
        acc2 += jnp.dot(lhs, w2_ref[dy], preferred_element_type=jnp.float32)
    rb = jnp.maximum(acc2 + b2_ref[...] + x.reshape(Bb * H, WC), 0.0)
    rb3 = rb.reshape(Bb, H, WC)                        # kept in vregs — no VMEM round-trip

    # ---- SE gate: global avg pool -> FC -> ReLU -> FC -> sigmoid ------------
    rowsum = jnp.sum(rb3, axis=1)                                              # (Bb, WC)
    g = jnp.dot(rowsum, fold_ref[...], preferred_element_type=jnp.float32) * inv_hw   # (Bb, C)
    z = jnp.maximum(
        jnp.dot(g, wf1_ref[...], preferred_element_type=jnp.float32) + bf1_ref[...], 0.0)
    s_wide = jax.nn.sigmoid(
        jnp.dot(z, wf2_ref[...], preferred_element_type=jnp.float32) + bf2_ref[...])  # (Bb, WC)

    # ---- channel-wise rescale + outer residual (lane-dense store) -----------
    out_ref[...] = rb3 * s_wide[:, None, :] + x


def _pick_batch_block(B, per_elem_bytes, budget_bytes=4 << 20):
    """Largest divisor of B fitting the VMEM budget, keeping >=2 grid steps (v7x: 2 TCs)."""
    cap = max(1, budget_bytes // max(1, per_elem_bytes))
    best = 1
    for bb in range(1, B + 1):
        if B % bb or bb > cap:
            continue
        if B == 1 or B // bb >= 2:
            best = bb
    return best


def se_forward(x_nchw, params):
    """Pallas SE forward.  Input/output are NCHW float32 (PyTorch convention)."""
    conv1_w, conv1_b, conv2_w, conv2_b, fc1_w, fc1_b, fc2_w, fc2_b = params
    B, C, H, W = x_nchw.shape
    Ch = fc1_w.shape[0]
    WC = W * C
    f32 = jnp.float32

    # ---- layout glue: NCHW -> (B, H, W*C) fused layout (no jnp.pad needed) ----
    # TODO(synk): the NCHW<->NHWC transposes still run as XLA copies in the wrapper;
    #             folding them into the kernel would need an in-kernel minor transpose.
    x = jnp.transpose(x_nchw, (0, 2, 3, 1)).astype(f32).reshape(B, H, WC)

    # ---- banded conv weights: Wb[dy][p*C+ci, q*C+co] = w[dy, p-q+1, ci, co] ----
    # (width zero-padding is encoded by the dropped out-of-range diagonals)
    sel = jnp.stack([jnp.eye(W, W, k=1 - dx, dtype=f32) for dx in range(3)])   # (3, W, W)

    def band(conv_w):
        wt = jnp.transpose(conv_w.astype(f32), (2, 3, 1, 0))                   # (dy, dx, ci, co)
        return jnp.einsum('xpq,yxio->ypiqo', sel, wt).reshape(3, WC, WC)

    w1b = band(conv1_w)
    w2b = band(conv2_w)
    b1w = jnp.tile(conv1_b.astype(f32), W).reshape(1, WC)
    b2w = jnp.tile(conv2_b.astype(f32), W).reshape(1, WC)

    fold = jnp.tile(jnp.eye(C, dtype=f32), (W, 1))                             # (WC, C)
    wf1 = fc1_w.astype(f32).T                                                  # (C, Ch)
    bf1 = fc1_b.astype(f32).reshape(1, Ch)
    wf2w = jnp.tile(fc2_w.astype(f32).T, (1, W))                               # (Ch, WC)
    bf2w = jnp.tile(fc2_b.astype(f32), W).reshape(1, WC)

    # ---- batch blocking: big lane-dense tiles per step, modest VMEM footprint ----
    per_elem = (2 * (H + 2) * WC + 8 * H * WC) * 4     # pad scratches + io blocks + live values
    Bb = _pick_batch_block(B, per_elem)
    grid = (B // Bb,)

    def wspec(shape):
        nd = len(shape)
        return pl.BlockSpec(shape, lambda g, _n=nd: (0,) * _n)

    out = pl.pallas_call(
        _se_kernel,
        out_shape=jax.ShapeDtypeStruct((B, H, WC), f32),
        grid_spec=pltpu.PrefetchScalarGridSpec(
            num_scalar_prefetch=0,
            grid=grid,
            in_specs=[
                pl.BlockSpec((Bb, H, WC), lambda g: (g, 0, 0)),
                wspec((3, WC, WC)), wspec((1, WC)),
                wspec((3, WC, WC)), wspec((1, WC)),
                wspec((WC, C)),
                wspec((C, Ch)), wspec((1, Ch)),
                wspec((Ch, WC)), wspec((1, WC)),
            ],
            out_specs=pl.BlockSpec((Bb, H, WC), lambda g: (g, 0, 0)),
            scratch_shapes=[
                pltpu.VMEM((Bb, H + 2, WC), jnp.float32),   # H-padded conv1 input
                pltpu.VMEM((Bb, H + 2, WC), jnp.float32),   # H-padded conv2 input
            ],
        ),
        compiler_params=pltpu.CompilerParams(
            dimension_semantics=("parallel",)),
    )(x, w1b, b1w, w2b, b2w, fold, wf1, bf1, wf2w, bf2w)

    out = out.reshape(B, H, W, C)
    return jnp.transpose(out, (0, 3, 1, 2))              # back to NCHW


def se_reference(x_nchw, params):
    """Pure-JAX reference matching the PyTorch forward semantics."""
    conv1_w, conv1_b, conv2_w, conv2_b, fc1_w, fc1_b, fc2_w, fc2_b = params

    def conv(x, w, b):
        y = jax.lax.conv_general_dilated(
            x, w, window_strides=(1, 1), padding=((1, 1), (1, 1)),
            dimension_numbers=("NCHW", "OIHW", "NCHW"))
        return y + b.reshape(1, -1, 1, 1)

    h = jax.nn.relu(conv(x_nchw, conv1_w, conv1_b))
    h = jax.nn.relu(conv(h, conv2_w, conv2_b) + x_nchw)        # RB
    g = jnp.mean(h, axis=(2, 3))                               # global average pool
    z = jax.nn.relu(g @ fc1_w.T + fc1_b)
    s = jax.nn.sigmoid(z @ fc2_w.T + fc2_b)
    y = h * s[:, :, None, None]
    return y + x_nchw


if __name__ == "__main__":
    key = jax.random.PRNGKey(0)
    B, C, H, W = 2, 8, 16, 16    # nin == nout == 8 (required by `y + input`), reduce=2
    Ch = C // 2
    ks = jax.random.split(key, 9)

    x = jax.random.normal(ks[0], (B, C, H, W), jnp.float32)
    params = (
        0.1 * jax.random.normal(ks[1], (C, C, 3, 3), jnp.float32),   # rb1 conv1 weight
        0.1 * jax.random.normal(ks[2], (C,), jnp.float32),           # rb1 conv1 bias
        0.1 * jax.random.normal(ks[3], (C, C, 3, 3), jnp.float32),   # rb1 conv2 weight
        0.1 * jax.random.normal(ks[4], (C,), jnp.float32),           # rb1 conv2 bias
        0.1 * jax.random.normal(ks[5], (Ch, C), jnp.float32),        # se Linear1 (out,in)
        0.1 * jax.random.normal(ks[6], (Ch,), jnp.float32),          # se Linear1 bias
        0.1 * jax.random.normal(ks[7], (C, Ch), jnp.float32),        # se Linear2 (out,in)
        0.1 * jax.random.normal(ks[8], (C,), jnp.float32),           # se Linear2 bias
    )

    out = jax.block_until_ready(se_forward(x, params))
    ref = jax.block_until_ready(se_reference(x, params))
    np.testing.assert_allclose(np.asarray(out), np.asarray(ref), rtol=1e-4, atol=1e-4)
    print("KERNEL_OK")
</pallas_src>

<mosaic_0001>
module attributes {stable_mosaic.version = 11 : i64} {
  func.func @_se_kernel(%arg0: i32, %arg1: memref<1x16x128xf32, #tpu.memory_space<vmem>>, %arg2: memref<3x128x128xf32, #tpu.memory_space<vmem>>, %arg3: memref<1x128xf32, #tpu.memory_space<vmem>>, %arg4: memref<3x128x128xf32, #tpu.memory_space<vmem>>, %arg5: memref<1x128xf32, #tpu.memory_space<vmem>>, %arg6: memref<128x8xf32, #tpu.memory_space<vmem>>, %arg7: memref<8x4xf32, #tpu.memory_space<vmem>>, %arg8: memref<1x4xf32, #tpu.memory_space<vmem>>, %arg9: memref<4x128xf32, #tpu.memory_space<vmem>>, %arg10: memref<1x128xf32, #tpu.memory_space<vmem>>, %arg11: memref<1x16x128xf32, #tpu.memory_space<vmem>>, %arg12: memref<1x18x128xf32, #tpu.memory_space<vmem>>, %arg13: memref<1x18x128xf32, #tpu.memory_space<vmem>>) attributes {dimension_semantics = [#tpu.dimension_semantics<parallel>], iteration_bounds = array<i64: 2>, scalar_prefetch = 0 : i64, scratch_operands = 2 : i64, tpu.core_type = #tpu.core_type<tc>, window_params = [{transform_indices = @transform_0, window_bounds = array<i64: 1, 16, 128>}, {pipeline_mode = #tpu.pipeline_mode<synchronous>, transform_indices = @transform_1, window_bounds = array<i64: 3, 128, 128>}, {pipeline_mode = #tpu.pipeline_mode<synchronous>, transform_indices = @transform_2, window_bounds = array<i64: 1, 128>}, {pipeline_mode = #tpu.pipeline_mode<synchronous>, transform_indices = @transform_3, window_bounds = array<i64: 3, 128, 128>}, {pipeline_mode = #tpu.pipeline_mode<synchronous>, transform_indices = @transform_4, window_bounds = array<i64: 1, 128>}, {pipeline_mode = #tpu.pipeline_mode<synchronous>, transform_indices = @transform_5, window_bounds = array<i64: 128, 8>}, {pipeline_mode = #tpu.pipeline_mode<synchronous>, transform_indices = @transform_6, window_bounds = array<i64: 8, 4>}, {pipeline_mode = #tpu.pipeline_mode<synchronous>, transform_indices = @transform_7, window_bounds = array<i64: 1, 4>}, {pipeline_mode = #tpu.pipeline_mode<synchronous>, transform_indices = @transform_8, window_bounds = array<i64: 4, 128>}, {pipeline_mode = #tpu.pipeline_mode<synchronous>, transform_indices = @transform_9, window_bounds = array<i64: 1, 128>}, {transform_indices = @transform_10, window_bounds = array<i64: 1, 16, 128>}]} {
    %c0 = arith.constant 0 : index
    %c0_0 = arith.constant 0 : index
    %c0_1 = arith.constant 0 : index
    %0 = vector.load %arg1[%c0, %c0_0, %c0_1] : memref<1x16x128xf32, #tpu.memory_space<vmem>>, vector<1x16x128xf32>
    %cst = arith.constant 0.000000e+00 : f32
    %1 = vector.broadcast %cst : f32 to vector<1x1x128xf32>
    %c0_2 = arith.constant 0 : index
    %c0_3 = arith.constant 0 : index
    %c0_4 = arith.constant 0 : index
    %2 = vector.load %arg12[%c0_2, %c0_3, %c0_4] : memref<1x18x128xf32, #tpu.memory_space<vmem>>, vector<1x1x128xf32>
    tpu.vector_store %arg12[%c0_2, %c0_3, %c0_4], %1 {strides = array<i32>} : memref<1x18x128xf32, #tpu.memory_space<vmem>>, vector<1x1x128xf32>,
    %c0_5 = arith.constant 0 : index
    %c17 = arith.constant 17 : index
    %c0_6 = arith.constant 0 : index
    %3 = vector.load %arg12[%c0_5, %c17, %c0_6] : memref<1x18x128xf32, #tpu.memory_space<vmem>>, vector<1x1x128xf32>
    tpu.vector_store %arg12[%c0_5, %c17, %c0_6], %1 {strides = array<i32>} : memref<1x18x128xf32, #tpu.memory_space<vmem>>, vector<1x1x128xf32>,
    %c0_7 = arith.constant 0 : index
    %c1 = arith.constant 1 : index
    %c0_8 = arith.constant 0 : index
    %4 = vector.load %arg12[%c0_7, %c1, %c0_8] : memref<1x18x128xf32, #tpu.memory_space<vmem>>, vector<1x16x128xf32>
    tpu.vector_store %arg12[%c0_7, %c1, %c0_8], %0 {strides = array<i32>} : memref<1x18x128xf32, #tpu.memory_space<vmem>>, vector<1x16x128xf32>,
    %cst_9 = arith.constant 0.000000e+00 : f32
    %5 = vector.broadcast %cst_9 : f32 to vector<16x128xf32>
    %c0_10 = arith.constant 0 : index
    %c0_11 = arith.constant 0 : index
    %c0_12 = arith.constant 0 : index
    %6 = vector.load %arg12[%c0_10, %c0_11, %c0_12] : memref<1x18x128xf32, #tpu.memory_space<vmem>>, vector<1x16x128xf32>
    %7 = vector.shape_cast %6 : vector<1x16x128xf32> to vector<16x128xf32>
    %c0_13 = arith.constant 0 : index
    %c0_14 = arith.constant 0 : index
    %c0_15 = arith.constant 0 : index
    %8 = vector.load %arg2[%c0_13, %c0_14, %c0_15] : memref<3x128x128xf32, #tpu.memory_space<vmem>>, vector<1x128x128xf32>
    %9 = vector.shape_cast %8 : vector<1x128x128xf32> to vector<128x128xf32>
    %cst_16 = arith.constant dense<0.000000e+00> : vector<16x128xf32>
    %10 = tpu.matmul %7, %9, %cst_16 {dimension_numbers = #tpu.dot_dimension_numbers<[1], [0], [0], [1], [0, 0, 1, 1], [], []>} : vector<16x128xf32>, vector<128x128xf32>, vector<16x128xf32> -> vector<16x128xf32>
    %11 = arith.addf %5, %10 : vector<16x128xf32>
    %c0_17 = arith.constant 0 : index
    %c1_18 = arith.constant 1 : index
    %c0_19 = arith.constant 0 : index
    %12 = vector.load %arg12[%c0_17, %c1_18, %c0_19] : memref<1x18x128xf32, #tpu.memory_space<vmem>>, vector<1x16x128xf32>
    %13 = vector.shape_cast %12 : vector<1x16x128xf32> to vector<16x128xf32>
    %c1_20 = arith.constant 1 : index
    %c0_21 = arith.constant 0 : index
    %c0_22 = arith.constant 0 : index
    %14 = vector.load %arg2[%c1_20, %c0_21, %c0_22] : memref<3x128x128xf32, #tpu.memory_space<vmem>>, vector<1x128x128xf32>
    %15 = vector.shape_cast %14 : vector<1x128x128xf32> to vector<128x128xf32>
    %cst_23 = arith.constant dense<0.000000e+00> : vector<16x128xf32>
    %16 = tpu.matmul %13, %15, %cst_23 {dimension_numbers = #tpu.dot_dimension_numbers<[1], [0], [0], [1], [0, 0, 1, 1], [], []>} : vector<16x128xf32>, vector<128x128xf32>, vector<16x128xf32> -> vector<16x128xf32>
    %17 = arith.addf %11, %16 : vector<16x128xf32>
    %c0_24 = arith.constant 0 : index
    %c2 = arith.constant 2 : index
    %c0_25 = arith.constant 0 : index
    %18 = vector.load %arg12[%c0_24, %c2, %c0_25] : memref<1x18x128xf32, #tpu.memory_space<vmem>>, vector<1x16x128xf32>
    %19 = vector.shape_cast %18 : vector<1x16x128xf32> to vector<16x128xf32>
    %c2_26 = arith.constant 2 : index
    %c0_27 = arith.constant 0 : index
    %c0_28 = arith.constant 0 : index
    %20 = vector.load %arg2[%c2_26, %c0_27, %c0_28] : memref<3x128x128xf32, #tpu.memory_space<vmem>>, vector<1x128x128xf32>
    %21 = vector.shape_cast %20 : vector<1x128x128xf32> to vector<128x128xf32>
    %cst_29 = arith.constant dense<0.000000e+00> : vector<16x128xf32>
    %22 = tpu.matmul %19, %21, %cst_29 {dimension_numbers = #tpu.dot_dimension_numbers<[1], [0], [0], [1], [0, 0, 1, 1], [], []>} : vector<16x128xf32>, vector<128x128xf32>, vector<16x128xf32> -> vector<16x128xf32>
    %23 = arith.addf %17, %22 : vector<16x128xf32>
    %c0_30 = arith.constant 0 : index
    %c0_31 = arith.constant 0 : index
    %24 = vector.load %arg3[%c0_30, %c0_31] : memref<1x128xf32, #tpu.memory_space<vmem>>, vector<1x128xf32>
    %25 = vector.broadcast %24 : vector<1x128xf32> to vector<16x128xf32>
    %26 = arith.addf %23, %25 : vector<16x128xf32>
    %cst_32 = arith.constant 0.000000e+00 : f32
    %27 = vector.broadcast %cst_32 : f32 to vector<16x128xf32>
    %28 = arith.maximumf %26, %27 : vector<16x128xf32>
    %c0_33 = arith.constant 0 : index
    %c0_34 = arith.constant 0 : index
    %c0_35 = arith.constant 0 : index
    %29 = vector.load %arg13[%c0_33, %c0_34, %c0_35] : memref<1x18x128xf32, #tpu.memory_space<vmem>>, vector<1x1x128xf32>
    tpu.vector_store %arg13[%c0_33, %c0_34, %c0_35], %1 {strides = array<i32>} : memref<1x18x128xf32, #tpu.memory_space<vmem>>, vector<1x1x128xf32>,
    %c0_36 = arith.constant 0 : index
    %c17_37 = arith.constant 17 : index
    %c0_38 = arith.constant 0 : index
    %30 = vector.load %arg13[%c0_36, %c17_37, %c0_38] : memref<1x18x128xf32, #tpu.memory_space<vmem>>, vector<1x1x128xf32>
    tpu.vector_store %arg13[%c0_36, %c17_37, %c0_38], %1 {strides = array<i32>} : memref<1x18x128xf32, #tpu.memory_space<vmem>>, vector<1x1x128xf32>,
    %31 = vector.shape_cast %28 : vector<16x128xf32> to vector<1x16x128xf32>
    %c0_39 = arith.constant 0 : index
    %c1_40 = arith.constant 1 : index
    %c0_41 = arith.constant 0 : index
    %32 = vector.load %arg13[%c0_39, %c1_40, %c0_41] : memref<1x18x128xf32, #tpu.memory_space<vmem>>, vector<1x16x128xf32>
    tpu.vector_store %arg13[%c0_39, %c1_40, %c0_41], %31 {strides = array<i32>} : memref<1x18x128xf32, #tpu.memory_space<vmem>>, vector<1x16x128xf32>,
    %cst_42 = arith.constant 0.000000e+00 : f32
    %33 = vector.broadcast %cst_42 : f32 to vector<16x128xf32>
    %c0_43 = arith.constant 0 : index
    %c0_44 = arith.constant 0 : index
    %c0_45 = arith.constant 0 : index
    %34 = vector.load %arg13[%c0_43, %c0_44, %c0_45] : memref<1x18x128xf32, #tpu.memory_space<vmem>>, vector<1x16x128xf32>
    %35 = vector.shape_cast %34 : vector<1x16x128xf32> to vector<16x128xf32>
    %c0_46 = arith.constant 0 : index
    %c0_47 = arith.constant 0 : index
    %c0_48 = arith.constant 0 : index
    %36 = vector.load %arg4[%c0_46, %c0_47, %c0_48] : memref<3x128x128xf32, #tpu.memory_space<vmem>>, vector<1x128x128xf32>
    %37 = vector.shape_cast %36 : vector<1x128x128xf32> to vector<128x128xf32>
    %cst_49 = arith.constant dense<0.000000e+00> : vector<16x128xf32>
    %38 = tpu.matmul %35, %37, %cst_49 {dimension_numbers = #tpu.dot_dimension_numbers<[1], [0], [0], [1], [0, 0, 1, 1], [], []>} : vector<16x128xf32>, vector<128x128xf32>, vector<16x128xf32> -> vector<16x128xf32>
    %39 = arith.addf %33, %38 : vector<16x128xf32>
    %c0_50 = arith.constant 0 : index
    %c1_51 = arith.constant 1 : index
    %c0_52 = arith.constant 0 : index
    %40 = vector.load %arg13[%c0_50, %c1_51, %c0_52] : memref<1x18x128xf32, #tpu.memory_space<vmem>>, vector<1x16x128xf32>
    %41 = vector.shape_cast %40 : vector<1x16x128xf32> to vector<16x128xf32>
    %c1_53 = arith.constant 1 : index
    %c0_54 = arith.constant 0 : index
    %c0_55 = arith.constant 0 : index
    %42 = vector.load %arg4[%c1_53, %c0_54, %c0_55] : memref<3x128x128xf32, #tpu.memory_space<vmem>>, vector<1x128x128xf32>
    %43 = vector.shape_cast %42 : vector<1x128x128xf32> to vector<128x128xf32>
    %cst_56 = arith.constant dense<0.000000e+00> : vector<16x128xf32>
    %44 = tpu.matmul %41, %43, %cst_56 {dimension_numbers = #tpu.dot_dimension_numbers<[1], [0], [0], [1], [0, 0, 1, 1], [], []>} : vector<16x128xf32>, vector<128x128xf32>, vector<16x128xf32> -> vector<16x128xf32>
    %45 = arith.addf %39, %44 : vector<16x128xf32>
    %c0_57 = arith.constant 0 : index
    %c2_58 = arith.constant 2 : index
    %c0_59 = arith.constant 0 : index
    %46 = vector.load %arg13[%c0_57, %c2_58, %c0_59] : memref<1x18x128xf32, #tpu.memory_space<vmem>>, vector<1x16x128xf32>
    %47 = vector.shape_cast %46 : vector<1x16x128xf32> to vector<16x128xf32>
    %c2_60 = arith.constant 2 : index
    %c0_61 = arith.constant 0 : index
    %c0_62 = arith.constant 0 : index
    %48 = vector.load %arg4[%c2_60, %c0_61, %c0_62] : memref<3x128x128xf32, #tpu.memory_space<vmem>>, vector<1x128x128xf32>
    %49 = vector.shape_cast %48 : vector<1x128x128xf32> to vector<128x128xf32>
    %cst_63 = arith.constant dense<0.000000e+00> : vector<16x128xf32>
    %50 = tpu.matmul %47, %49, %cst_63 {dimension_numbers = #tpu.dot_dimension_numbers<[1], [0], [0], [1], [0, 0, 1, 1], [], []>} : vector<16x128xf32>, vector<128x128xf32>, vector<16x128xf32> -> vector<16x128xf32>
    %51 = arith.addf %45, %50 : vector<16x128xf32>
    %c0_64 = arith.constant 0 : index
    %c0_65 = arith.constant 0 : index
    %52 = vector.load %arg5[%c0_64, %c0_65] : memref<1x128xf32, #tpu.memory_space<vmem>>, vector<1x128xf32>
    %53 = vector.broadcast %52 : vector<1x128xf32> to vector<16x128xf32>
    %54 = arith.addf %51, %53 : vector<16x128xf32>
    %55 = vector.shape_cast %0 : vector<1x16x128xf32> to vector<16x128xf32>
    %56 = arith.addf %54, %55 : vector<16x128xf32>
    %cst_66 = arith.constant 0.000000e+00 : f32
    %57 = vector.broadcast %cst_66 : f32 to vector<16x128xf32>
    %58 = arith.maximumf %56, %57 : vector<16x128xf32>
    %59 = vector.shape_cast %58 : vector<16x128xf32> to vector<1x16x128xf32>
    %cst_67 = arith.constant dense<0.000000e+00> : vector<1x128xf32>
    %60 = vector.multi_reduction <add>, %59, %cst_67 [1] : vector<1x16x128xf32> to vector<1x128xf32>
    %c0_68 = arith.constant 0 : index
    %c0_69 = arith.constant 0 : index
    %61 = vector.load %arg6[%c0_68, %c0_69] : memref<128x8xf32, #tpu.memory_space<vmem>>, vector<128x8xf32>
    %cst_70 = arith.constant dense<0.000000e+00> : vector<1x8xf32>
    %62 = tpu.matmul %60, %61, %cst_70 {dimension_numbers = #tpu.dot_dimension_numbers<[1], [0], [0], [1], [0, 0, 1, 1], [], []>} : vector<1x128xf32>, vector<128x8xf32>, vector<1x8xf32> -> vector<1x8xf32>
    %cst_71 = arith.constant 3.906250e-03 : f32
    %63 = vector.broadcast %cst_71 : f32 to vector<1x8xf32>
    %64 = arith.mulf %62, %63 : vector<1x8xf32>
    %c0_72 = arith.constant 0 : index
    %c0_73 = arith.constant 0 : index
    %65 = vector.load %arg7[%c0_72, %c0_73] : memref<8x4xf32, #tpu.memory_space<vmem>>, vector<8x4xf32>
    %cst_74 = arith.constant dense<0.000000e+00> : vector<1x4xf32>
    %66 = tpu.matmul %64, %65, %cst_74 {dimension_numbers = #tpu.dot_dimension_numbers<[1], [0], [0], [1], [0, 0, 1, 1], [], []>} : vector<1x8xf32>, vector<8x4xf32>, vector<1x4xf32> -> vector<1x4xf32>
    %c0_75 = arith.constant 0 : index
    %c0_76 = arith.constant 0 : index
    %67 = vector.load %arg8[%c0_75, %c0_76] : memref<1x4xf32, #tpu.memory_space<vmem>>, vector<1x4xf32>
    %68 = arith.addf %66, %67 : vector<1x4xf32>
    %cst_77 = arith.constant 0.000000e+00 : f32
    %69 = vector.broadcast %cst_77 : f32 to vector<1x4xf32>
    %70 = arith.maximumf %68, %69 : vector<1x4xf32>
    %c0_78 = arith.constant 0 : index
    %c0_79 = arith.constant 0 : index
    %71 = vector.load %arg9[%c0_78, %c0_79] : memref<4x128xf32, #tpu.memory_space<vmem>>, vector<4x128xf32>
    %cst_80 = arith.constant dense<0.000000e+00> : vector<1x128xf32>
    %72 = tpu.matmul %70, %71, %cst_80 {dimension_numbers = #tpu.dot_dimension_numbers<[1], [0], [0], [1], [0, 0, 1, 1], [], []>} : vector<1x4xf32>, vector<4x128xf32>, vector<1x128xf32> -> vector<1x128xf32>
    %c0_81 = arith.constant 0 : index
    %c0_82 = arith.constant 0 : index
    %73 = vector.load %arg10[%c0_81, %c0_82] : memref<1x128xf32, #tpu.memory_space<vmem>>, vector<1x128xf32>
    %74 = arith.addf %72, %73 : vector<1x128xf32>
    %75 = arith.negf %74 : vector<1x128xf32>
    %76 = math.exp %75 : vector<1x128xf32>
    %cst_83 = arith.constant 1.000000e+00 : f32
    %77 = vector.broadcast %cst_83 : f32 to vector<1x128xf32>
    %78 = arith.addf %77, %76 : vector<1x128xf32>
    %79 = arith.divf %77, %78 : vector<1x128xf32>
    %80 = vector.shape_cast %79 : vector<1x128xf32> to vector<1x1x128xf32>
    %81 = vector.broadcast %80 : vector<1x1x128xf32> to vector<1x16x128xf32>
    %82 = arith.mulf %59, %81 : vector<1x16x128xf32>
    %83 = arith.addf %82, %0 : vector<1x16x128xf32>
    %c0_84 = arith.constant 0 : index
    %c0_85 = arith.constant 0 : index
    %c0_86 = arith.constant 0 : index
    %84 = vector.load %arg11[%c0_84, %c0_85, %c0_86] : memref<1x16x128xf32, #tpu.memory_space<vmem>>, vector<1x16x128xf32>
    tpu.vector_store %arg11[%c0_84, %c0_85, %c0_86], %83 {strides = array<i32>} : memref<1x16x128xf32, #tpu.memory_space<vmem>>, vector<1x16x128xf32>,
    return
  }
  func.func @transform_0(%arg0: i32) -> (i32, i32, i32) {
    %c0_i32 = arith.constant 0 : i32
    %c0_i32_0 = arith.constant 0 : i32
    %c0_i32_1 = arith.constant 0 : i32
    return %arg0, %c0_i32, %c0_i32_0 : i32, i32, i32
  }
  func.func @transform_1(%arg0: i32) -> (i32, i32, i32) {
    %c0_i32 = arith.constant 0 : i32
    %c0_i32_0 = arith.constant 0 : i32
    %c0_i32_1 = arith.constant 0 : i32
    %c0_i32_2 = arith.constant 0 : i32
    return %c0_i32, %c0_i32_0, %c0_i32_1 : i32, i32, i32
  }
  func.func @transform_2(%arg0: i32) -> (i32, i32) {
    %c0_i32 = arith.constant 0 : i32
    %c0_i32_0 = arith.constant 0 : i32
    %c0_i32_1 = arith.constant 0 : i32
    return %c0_i32, %c0_i32_0 : i32, i32
  }
  func.func @transform_3(%arg0: i32) -> (i32, i32, i32) {
    %c0_i32 = arith.constant 0 : i32
    %c0_i32_0 = arith.constant 0 : i32
    %c0_i32_1 = arith.constant 0 : i32
    %c0_i32_2 = arith.constant 0 : i32
    return %c0_i32, %c0_i32_0, %c0_i32_1 : i32, i32, i32
  }
  func.func @transform_4(%arg0: i32) -> (i32, i32) {
    %c0_i32 = arith.constant 0 : i32
    %c0_i32_0 = arith.constant 0 : i32
    %c0_i32_1 = arith.constant 0 : i32
    return %c0_i32, %c0_i32_0 : i32, i32
  }
  func.func @transform_5(%arg0: i32) -> (i32, i32) {
    %c0_i32 = arith.constant 0 : i32
    %c0_i32_0 = arith.constant 0 : i32
    %c0_i32_1 = arith.constant 0 : i32
    return %c0_i32, %c0_i32_0 : i32, i32
  }
  func.func @transform_6(%arg0: i32) -> (i32, i32) {
    %c0_i32 = arith.constant 0 : i32
    %c0_i32_0 = arith.constant 0 : i32
    %c0_i32_1 = arith.constant 0 : i32
    return %c0_i32, %c0_i32_0 : i32, i32
  }
  func.func @transform_7(%arg0: i32) -> (i32, i32) {
    %c0_i32 = arith.constant 0 : i32
    %c0_i32_0 = arith.constant 0 : i32
    %c0_i32_1 = arith.constant 0 : i32
    return %c0_i32, %c0_i32_0 : i32, i32
  }
  func.func @transform_8(%arg0: i32) -> (i32, i32) {
    %c0_i32 = arith.constant 0 : i32
    %c0_i32_0 = arith.constant 0 : i32
    %c0_i32_1 = arith.constant 0 : i32
    return %c0_i32, %c0_i32_0 : i32, i32
  }
  func.func @transform_9(%arg0: i32) -> (i32, i32) {
    %c0_i32 = arith.constant 0 : i32
    %c0_i32_0 = arith.constant 0 : i32
    %c0_i32_1 = arith.constant 0 : i32
    return %c0_i32, %c0_i32_0 : i32, i32
  }
  func.func @transform_10(%arg0: i32) -> (i32, i32, i32) {
    %c0_i32 = arith.constant 0 : i32
    %c0_i32_0 = arith.constant 0 : i32
    %c0_i32_1 = arith.constant 0 : i32
    return %arg0, %c0_i32, %c0_i32_0 : i32, i32, i32
  }
}

</mosaic_0001>

<llo_original>
// kernel: tpu_custom_call.1
$region0: #{tpu_custom_call.1}
  #allocation0 [shape = 'u32[]', space=smem, size = 0x4, offset = 0x4, fixed_abs, tag = 'smem constant byte address 0x4 - core index']
  #allocation1 [shape = 'u32[144,128]{1,0:T(1,128)}', space=vmem, size = 0x12000, scoped, tag = 'internal scratch']
  #allocation2 [shape = 'f32[1,18,128]{2,1,0:T(8,128)}', space=vmem, size = 0x3000, scoped, tag = 'scratch operand']
  #allocation3 [shape = 'f32[1,18,128]{2,1,0:T(8,128)}', space=vmem, size = 0x3000, scoped, tag = 'scratch operand']
  %s0 = inlined_call_operand.vmem [shape: f32[2,16,128], index: 0, kind: input, shape index: {}]
  %s1 = inlined_call_operand.hbm [shape: f32[3,128,128], index: 1, kind: input, shape index: {}]
  %s2 = inlined_call_operand.vmem [shape: f32[1,128], index: 2, kind: input, shape index: {}]
  %s3 = inlined_call_operand.hbm [shape: f32[3,128,128], index: 3, kind: input, shape index: {}]
  %s4 = inlined_call_operand.vmem [shape: f32[1,128], index: 4, kind: input, shape index: {}]
  %s5 = inlined_call_operand.vmem [shape: f32[128,8], index: 5, kind: input, shape index: {}]
  %s6 = inlined_call_operand.vmem [shape: f32[8,4], index: 6, kind: input, shape index: {}]
  %s7 = inlined_call_operand.vmem [shape: f32[1,4], index: 7, kind: input, shape index: {}]
  %s8 = inlined_call_operand.vmem [shape: f32[4,128], index: 8, kind: input, shape index: {}]
  %s9 = inlined_call_operand.vmem [shape: f32[1,128], index: 9, kind: input, shape index: {}]
  %s10 = inlined_call_operand.hbm [shape: f32[2,16,128], index: 10, kind: output, shape index: {}]
  %s11 = sld [smem:[#allocation0]]
  $region81: #{tpu_custom_call.1} parent=0
    _
  %s13 = ssub.s32 1, %s11
  %s14 = scalar_select 0, %s13, %s11
  $region1: #{tpu_custom_call.1} parent=0
    #allocation4 [shape = 'u8[196608]{0}', space=vmem, size = 0x30000, scoped, tag = 'input window, operand 1, single buffered']
    #allocation5 [shape = 's32[2]{0}', space=sflag, size = 0x8, scoped, tag = 'scoped memory for tpu_custom_call.1']
    #allocation6 [shape = 's32[2]{0}', space=sflag, size = 0x8, scoped, tag = 'scoped memory for tpu_custom_call.1']
    #allocation7 [shape = 'u8[196608]{0}', space=vmem, size = 0x30000, scoped, tag = 'input window, operand 3, single buffered']
    #allocation8 [shape = 's32[1]{0}', space=sflag, size = 0x4, scoped, tag = 'scoped memory for tpu_custom_call.1']
    #allocation9 [shape = 'u8[16384]{0}', space=vmem, size = 0x4000, scoped, tag = 'output window, operand 0']
    %15 = vsyncpa [#allocation5], 0
    %16 = vsyncpa [#allocation8], 0
    %17 = vsyncpa [#allocation6], 0
    %s18 = scalar_lea.sflag [#allocation6], 1
    %19 = vsyncpa %s18, 0
    loop: start=0, step=1, limit=4
    $region2: #{tpu_custom_call.1} parent=1 // loop_pre_header
      _
    $region3: #{tpu_custom_call.1} parent=1 // loop_header
      %s21 = sphi 0, %s25
      %p22 = scmp.ge.s32.totalorder %s21, 4
      %s31 = sphi 0, %s33
      %s34 = sphi 0, %s31
      %s35 = sphi 0, %s34
      %s51 = sphi 0, %s35
      %s55 = sphi 0, %s55
      %s57 = sphi 0, %s55
      %s58 = sphi 0, %s57
      %s72 = sphi 0, %s58
      %s76 = sphi 0, %s76
      %s78 = sphi 0, %s76
      %s79 = sphi 0, %s78
      %s93 = sphi 0, %s79
      %s97 = sphi 0, %s97
      %s99 = sphi 0, %s97
      %s100 = sphi 0, %s99
      %s114 = sphi 0, %s100
      %s118 = sphi 0, %s118
      %s120 = sphi 0, %s118
      %s121 = sphi 0, %s120
      %s135 = sphi 0, %s121
      %s139 = sphi 0, %s139
      %s141 = sphi 0, %s139
      %s142 = sphi 0, %s141
      %s156 = sphi 0, %s142
      %s160 = sphi 0, %s160
      %s162 = sphi 0, %s160
      %s163 = sphi 0, %s162
      %s177 = sphi 0, %s163
      %s181 = sphi 0, %s181
      %s183 = sphi 0, %s181
      %s184 = sphi 0, %s183
      %s198 = sphi 0, %s184
      %s202 = sphi 0, %s202
      %s204 = sphi 0, %s202
      %s205 = sphi 0, %s204
      %s219 = sphi 0, %s205
      %s223 = sphi 0, %s223
      %s225 = sphi 0, %s223
      %s226 = sphi 0, %s225
      %s240 = sphi 0, %s226
      %s246 = sphi 0, %s248
      %s249 = sphi 0, %s246
      %s250 = sphi 0, %s249
      %s266 = sphi 0, %s250
    $region4: #{tpu_custom_call.1} parent=1 // loop_header_branch
      %24 = sbr.rel (%p22) target = $region8
    $region5: #{tpu_custom_call.1} parent=1 // loop_body
      %s26 = ssub.s32 %s21, 1
      %s27 = ssub.s32 %s21, 2
      %s28 = sadd.s32 %s21, 1
      %s29 = ssub.s32 %s21, %s28
      %p30 = scmp.eq.s32.totalorder %s29, 0
      %s32 = sadd.s32 %s31, 1
      %s33 = scalar_select %p30, %s31, %s32
      %p36 = pneg %p30
      %p37 = scmp.eq.s32.totalorder %s21, 1
      %p38 = por %p36, %p37
      %p39 = scmp.ne.s32.totalorder %s31, %s34
      %p40 = scmp.eq.s32.totalorder %s21, 0
      %p41 = por %p39, %p40
      %p42 = scmp.ne.s32.totalorder %s31, %s34
      %p43 = scmp.eq.s32.totalorder %s26, 1
      %p44 = por %p42, %p43
      %p45 = scmp.ne.s32.totalorder %s34, %s35
      %p46 = scmp.eq.s32.totalorder %s26, 0
      %p47 = por %p45, %p46
      %p48 = scmp.ne.s32.totalorder %s34, %s35
      %p49 = scmp.eq.s32.totalorder %s27, 1
      %p50 = por %p48, %p49
      %p52 = scmp.ne.s32.totalorder %s35, %s51
      %p53 = scmp.eq.s32.totalorder %s27, 0
      %p54 = por %p52, %p53
      %s56 = sadd.s32 %s55, 1
      %p59 = scmp.eq.s32.totalorder %s21, 1
      %p60 = scmp.ne.s32.totalorder %s55, %s57
      %p61 = scmp.eq.s32.totalorder %s21, 0
      %p62 = por %p60, %p61
      %p63 = scmp.ne.s32.totalorder %s55, %s57
      %p64 = scmp.eq.s32.totalorder %s26, 1
      %p65 = por %p63, %p64
      %p66 = scmp.ne.s32.totalorder %s57, %s58
      %p67 = scmp.eq.s32.totalorder %s26, 0
      %p68 = por %p66, %p67
      %p69 = scmp.ne.s32.totalorder %s57, %s58
      %p70 = scmp.eq.s32.totalorder %s27, 1
      %p71 = por %p69, %p70
      %p73 = scmp.ne.s32.totalorder %s58, %s72
      %p74 = scmp.eq.s32.totalorder %s27, 0
      %p75 = por %p73, %p74
      %s77 = sadd.s32 %s76, 1
      %p80 = scmp.eq.s32.totalorder %s21, 1
      %p81 = scmp.ne.s32.totalorder %s76, %s78
      %p82 = scmp.eq.s32.totalorder %s21, 0
      %p83 = por %p81, %p82
      %p84 = scmp.ne.s32.totalorder %s76, %s78
      %p85 = scmp.eq.s32.totalorder %s26, 1
      %p86 = por %p84, %p85
      %p87 = scmp.ne.s32.totalorder %s78, %s79
      %p88 = scmp.eq.s32.totalorder %s26, 0
      %p89 = por %p87, %p88
      %p90 = scmp.ne.s32.totalorder %s78, %s79
      %p91 = scmp.eq.s32.totalorder %s27, 1
      %p92 = por %p90, %p91
      %p94 = scmp.ne.s32.totalorder %s79, %s93
      %p95 = scmp.eq.s32.totalorder %s27, 0
      %p96 = por %p94, %p95
      %s98 = sadd.s32 %s97, 1
      %p101 = scmp.eq.s32.totalorder %s21, 1
      %p102 = scmp.ne.s32.totalorder %s97, %s99
      %p103 = scmp.eq.s32.totalorder %s21, 0
      %p104 = por %p102, %p103
      %p105 = scmp.ne.s32.totalorder %s97, %s99
      %p106 = scmp.eq.s32.totalorder %s26, 1
      %p107 = por %p105, %p106
      %p108 = scmp.ne.s32.totalorder %s99, %s100
      %p109 = scmp.eq.s32.totalorder %s26, 0
      %p110 = por %p108, %p109
      %p111 = scmp.ne.s32.totalorder %s99, %s100
      %p112 = scmp.eq.s32.totalorder %s27, 1
      %p113 = por %p111, %p112
      %p115 = scmp.ne.s32.totalorder %s100, %s114
      %p116 = scmp.eq.s32.totalorder %s27, 0
      %p117 = por %p115, %p116
      %s119 = sadd.s32 %s118, 1
      %p122 = scmp.eq.s32.totalorder %s21, 1
      %p123 = scmp.ne.s32.totalorder %s118, %s120
      %p124 = scmp.eq.s32.totalorder %s21, 0
      %p125 = por %p123, %p124
      %p126 = scmp.ne.s32.totalorder %s118, %s120
      %p127 = scmp.eq.s32.totalorder %s26, 1
      %p128 = por %p126, %p127
      %p129 = scmp.ne.s32.totalorder %s120, %s121
      %p130 = scmp.eq.s32.totalorder %s26, 0
      %p131 = por %p129, %p130
      %p132 = scmp.ne.s32.totalorder %s120, %s121
      %p133 = scmp.eq.s32.totalorder %s27, 1
      %p134 = por %p132, %p133
      %p136 = scmp.ne.s32.totalorder %s121, %s135
      %p137 = scmp.eq.s32.totalorder %s27, 0
      %p138 = por %p136, %p137
      %s140 = sadd.s32 %s139, 1
      %p143 = scmp.eq.s32.totalorder %s21, 1
      %p144 = scmp.ne.s32.totalorder %s139, %s141
      %p145 = scmp.eq.s32.totalorder %s21, 0
      %p146 = por %p144, %p145
      %p147 = scmp.ne.s32.totalorder %s139, %s141
      %p148 = scmp.eq.s32.totalorder %s26, 1
      %p149 = por %p147, %p148
      %p150 = scmp.ne.s32.totalorder %s141, %s142
      %p151 = scmp.eq.s32.totalorder %s26, 0
      %p152 = por %p150, %p151
      %p153 = scmp.ne.s32.totalorder %s141, %s142
      %p154 = scmp.eq.s32.totalorder %s27, 1
      %p155 = por %p153, %p154
      %p157 = scmp.ne.s32.totalorder %s142, %s156
      %p158 = scmp.eq.s32.totalorder %s27, 0
      %p159 = por %p157, %p158
      %s161 = sadd.s32 %s160, 1
      %p164 = scmp.eq.s32.totalorder %s21, 1
      %p165 = scmp.ne.s32.totalorder %s160, %s162
      %p166 = scmp.eq.s32.totalorder %s21, 0
      %p167 = por %p165, %p166
      %p168 = scmp.ne.s32.totalorder %s160, %s162
      %p169 = scmp.eq.s32.totalorder %s26, 1
      %p170 = por %p168, %p169
      %p171 = scmp.ne.s32.totalorder %s162, %s163
      %p172 = scmp.eq.s32.totalorder %s26, 0
      %p173 = por %p171, %p172
      %p174 = scmp.ne.s32.totalorder %s162, %s163
      %p175 = scmp.eq.s32.totalorder %s27, 1
      %p176 = por %p174, %p175
      %p178 = scmp.ne.s32.totalorder %s163, %s177
      %p179 = scmp.eq.s32.totalorder %s27, 0
      %p180 = por %p178, %p179
      %s182 = sadd.s32 %s181, 1
      %p185 = scmp.eq.s32.totalorder %s21, 1
      %p186 = scmp.ne.s32.totalorder %s181, %s183
      %p187 = scmp.eq.s32.totalorder %s21, 0
      %p188 = por %p186, %p187
      %p189 = scmp.ne.s32.totalorder %s181, %s183
      %p190 = scmp.eq.s32.totalorder %s26, 1
      %p191 = por %p189, %p190
      %p192 = scmp.ne.s32.totalorder %s183, %s184
      %p193 = scmp.eq.s32.totalorder %s26, 0
      %p194 = por %p192, %p193
      %p195 = scmp.ne.s32.totalorder %s183, %s184
      %p196 = scmp.eq.s32.totalorder %s27, 1
      %p197 = por %p195, %p196
      %p199 = scmp.ne.s32.totalorder %s184, %s198
      %p200 = scmp.eq.s32.totalorder %s27, 0
      %p201 = por %p199, %p200
      %s203 = sadd.s32 %s202, 1
      %p206 = scmp.eq.s32.totalorder %s21, 1
      %p207 = scmp.ne.s32.totalorder %s202, %s204
      %p208 = scmp.eq.s32.totalorder %s21, 0
      %p209 = por %p207, %p208
      %p210 = scmp.ne.s32.totalorder %s202, %s204
      %p211 = scmp.eq.s32.totalorder %s26, 1
      %p212 = por %p210, %p211
      %p213 = scmp.ne.s32.totalorder %s204, %s205
      %p214 = scmp.eq.s32.totalorder %s26, 0
      %p215 = por %p213, %p214
      %p216 = scmp.ne.s32.totalorder %s204, %s205
      %p217 = scmp.eq.s32.totalorder %s27, 1
      %p218 = por %p216, %p217
      %p220 = scmp.ne.s32.totalorder %s205, %s219
      %p221 = scmp.eq.s32.totalorder %s27, 0
      %p222 = por %p220, %p221
      %s224 = sadd.s32 %s223, 1
      %p227 = scmp.eq.s32.totalorder %s21, 1
      %p228 = scmp.ne.s32.totalorder %s223, %s225
      %p229 = scmp.eq.s32.totalorder %s21, 0
      %p230 = por %p228, %p229
      %p231 = scmp.ne.s32.totalorder %s223, %s225
      %p232 = scmp.eq.s32.totalorder %s26, 1
      %p233 = por %p231, %p232
      %p234 = scmp.ne.s32.totalorder %s225, %s226
      %p235 = scmp.eq.s32.totalorder %s26, 0
      %p236 = por %p234, %p235
      %p237 = scmp.ne.s32.totalorder %s225, %s226
      %p238 = scmp.eq.s32.totalorder %s27, 1
      %p239 = por %p237, %p238
      %p241 = scmp.ne.s32.totalorder %s226, %s240
      %p242 = scmp.eq.s32.totalorder %s27, 0
      %p243 = por %p241, %p242
      %s244 = ssub.s32 %s21, %s28
      %p245 = scmp.eq.s32.totalorder %s244, 0
      %s247 = sadd.s32 %s246, 1
      %s248 = scalar_select %p245, %s246, %s247
      %p251 = pneg %p245
      %p252 = scmp.eq.s32.totalorder %s21, 1
      %p253 = por %p251, %p252
      %p254 = scmp.ne.s32.totalorder %s246, %s249
      %p255 = scmp.eq.s32.totalorder %s21, 0
      %p256 = por %p254, %p255
      %p257 = scmp.ne.s32.totalorder %s246, %s249
      %p258 = scmp.eq.s32.totalorder %s26, 1
      %p259 = por %p257, %p258
      %p260 = scmp.ne.s32.totalorder %s249, %s250
      %p261 = scmp.eq.s32.totalorder %s26, 0
      %p262 = por %p260, %p261
      %p263 = scmp.ne.s32.totalorder %s249, %s250
      %p264 = scmp.eq.s32.totalorder %s27, 1
      %p265 = por %p263, %p264
      %p267 = scmp.ne.s32.totalorder %s250, %s266
      %p268 = scmp.eq.s32.totalorder %s27, 0
      %p269 = por %p267, %p268
      %p270 = scmp.le.s32.totalorder 1, %s21
      %p271 = scmp.lt.s32.totalorder %s21, 3
      %p272 = pnand %p270, %p271
      %p273 = pneg %p272
      // Predicated region
      $region9: #{tpu_custom_call.1} parent=5 // pred_check
        _
      $region10: #{tpu_custom_call.1} parent=5 // pred_check_branch
        %275 = sbr.rel (%p272) target = $region12
      $region11: #{tpu_custom_call.1} parent=5 // pred_region
        %s276 = ssub.s32 %s21, 1
        // Predicated region
        $region13: #{tpu_custom_call.1} parent=11 // pred_check
          %p277 = pneg %p68
        $region14: #{tpu_custom_call.1} parent=11 // pred_check_branch
          %279 = sbr.rel (%p277) target = $region16
        $region15: #{tpu_custom_call.1} parent=11 // pred_region
          %s281 = ssub.s32 6144, 6144
          %282 = vsyncadd [#allocation5], %s281
          %s283 = sshll.u32 [#allocation4], 4
          %s284 = int_to_ptr.vmem [resolvable:$true] %s283
          %289 = dma.hbm_to_vmem [thread:$0]  %s1, 6144, %s284, [#allocation5], 128, 128, 8
        $region16: #{tpu_custom_call.1} parent=11 // pred_fallthru
          _
        // Predicated region
        $region17: #{tpu_custom_call.1} parent=11 // pred_check
          %p290 = pneg %p89
        $region18: #{tpu_custom_call.1} parent=11 // pred_check_branch
          %292 = sbr.rel (%p290) target = $region20
        $region19: #{tpu_custom_call.1} parent=11 // pred_region
          _
        $region20: #{tpu_custom_call.1} parent=11 // pred_fallthru
          _
        // Predicated region
        $region21: #{tpu_custom_call.1} parent=11 // pred_check
          %p293 = pneg %p110
        $region22: #{tpu_custom_call.1} parent=11 // pred_check_branch
          %295 = sbr.rel (%p293) target = $region24
        $region23: #{tpu_custom_call.1} parent=11 // pred_region
          %s297 = ssub.s32 6144, 6144
          %298 = vsyncadd [#allocation8], %s297
          %s299 = sshll.u32 [#allocation7], 4
          %s300 = int_to_ptr.vmem [resolvable:$true] %s299
          %305 = dma.hbm_to_vmem [thread:$0]  %s3, 6144, %s300, [#allocation8], 128, 128, 8
        $region24: #{tpu_custom_call.1} parent=11 // pred_fallthru
          _
        // Predicated region
        $region25: #{tpu_custom_call.1} parent=11 // pred_check
          %p306 = pneg %p131
        $region26: #{tpu_custom_call.1} parent=11 // pred_check_branch
          %308 = sbr.rel (%p306) target = $region28
        $region27: #{tpu_custom_call.1} parent=11 // pred_region
          _
        $region28: #{tpu_custom_call.1} parent=11 // pred_fallthru
          _
        // Predicated region
        $region29: #{tpu_custom_call.1} parent=11 // pred_check
          %p309 = pneg %p152
        $region30: #{tpu_custom_call.1} parent=11 // pred_check_branch
          %311 = sbr.rel (%p309) target = $region32
        $region31: #{tpu_custom_call.1} parent=11 // pred_region
          _
        $region32: #{tpu_custom_call.1} parent=11 // pred_fallthru
          _
        // Predicated region
        $region33: #{tpu_custom_call.1} parent=11 // pred_check
          %p312 = pneg %p173
        $region34: #{tpu_custom_call.1} parent=11 // pred_check_branch
          %314 = sbr.rel (%p312) target = $region36
        $region35: #{tpu_custom_call.1} parent=11 // pred_region
          _
        $region36: #{tpu_custom_call.1} parent=11 // pred_fallthru
          _
        // Predicated region
        $region37: #{tpu_custom_call.1} parent=11 // pred_check
          %p315 = pneg %p194
        $region38: #{tpu_custom_call.1} parent=11 // pred_check_branch
          %317 = sbr.rel (%p315) target = $region40
        $region39: #{tpu_custom_call.1} parent=11 // pred_region
          _
        $region40: #{tpu_custom_call.1} parent=11 // pred_fallthru
          _
        // Predicated region
        $region41: #{tpu_custom_call.1} parent=11 // pred_check
          %p318 = pneg %p215
        $region42: #{tpu_custom_call.1} parent=11 // pred_check_branch
          %320 = sbr.rel (%p318) target = $region44
        $region43: #{tpu_custom_call.1} parent=11 // pred_region
          _
        $region44: #{tpu_custom_call.1} parent=11 // pred_fallthru
          _
        // Predicated region
        $region45: #{tpu_custom_call.1} parent=11 // pred_check
          %p321 = pneg %p236
        $region46: #{tpu_custom_call.1} parent=11 // pred_check_branch
          %323 = sbr.rel (%p321) target = $region48
        $region47: #{tpu_custom_call.1} parent=11 // pred_region
          _
        $region48: #{tpu_custom_call.1} parent=11 // pred_fallthru
          _
      $region12: #{tpu_custom_call.1} parent=5 // pred_fallthru
        _
      %p324 = scmp.lt.s32.totalorder %s21, 2
      // Predicated region
      $region49: #{tpu_custom_call.1} parent=5 // pred_check
        %p325 = pneg %p324
      $region50: #{tpu_custom_call.1} parent=5 // pred_check_branch
        %327 = sbr.rel (%p325) target = $region52
      $region51: #{tpu_custom_call.1} parent=5 // pred_region
        // Predicated region
        $region53: #{tpu_custom_call.1} parent=51 // pred_check
          %p328 = pneg %p41
        $region54: #{tpu_custom_call.1} parent=51 // pred_check_branch
          %330 = sbr.rel (%p328) target = $region56
        $region55: #{tpu_custom_call.1} parent=51 // pred_region
          %p331 = scmp.lt.s32.totalorder %s21, 1
          %s332 = scalar_select %p331, %s21, 1
          %s333 = smul.addr %s332, 2
          %s334 = smul.addr %s333, 8
          %s335 = scalar_lea.vmem %s0, %s334
        $region56: #{tpu_custom_call.1} parent=51 // pred_fallthru
          _
      $region52: #{tpu_custom_call.1} parent=5 // pred_fallthru
        _
      %p336 = scmp.le.s32.totalorder 1, %s21
      %p337 = scmp.lt.s32.totalorder %s21, 3
      %p338 = pnand %p336, %p337
      %p339 = pneg %p338
      // Predicated region
      $region57: #{tpu_custom_call.1} parent=5 // pred_check
        _
      $region58: #{tpu_custom_call.1} parent=5 // pred_check_branch
        %341 = sbr.rel (%p338) target = $region60
      $region59: #{tpu_custom_call.1} parent=5 // pred_region
        %s342 = ssub.s32 %s21, 1
        // Predicated region
        $region61: #{tpu_custom_call.1} parent=59 // pred_check
          %p343 = pneg %p68
        $region62: #{tpu_custom_call.1} parent=59 // pred_check_branch
          %345 = sbr.rel (%p343) target = $region64
        $region63: #{tpu_custom_call.1} parent=59 // pred_region
          %346 = dma.done [#allocation5], 6144
        $region64: #{tpu_custom_call.1} parent=59 // pred_fallthru
          _
        // Predicated region
        $region65: #{tpu_custom_call.1} parent=59 // pred_check
          %p347 = pneg %p110
        $region66: #{tpu_custom_call.1} parent=59 // pred_check_branch
          %349 = sbr.rel (%p347) target = $region68
        $region67: #{tpu_custom_call.1} parent=59 // pred_region
          %350 = dma.done [#allocation8], 6144
        $region68: #{tpu_custom_call.1} parent=59 // pred_fallthru
          _
        %p351 = scmp.lt.s32.totalorder %s26, 1
        %s352 = scalar_select %p351, %s26, 1
        %s353 = smul.addr %s352, 2
        %s354 = smul.addr %s353, 8
        %s355 = scalar_lea.vmem %s0, %s354
        %p356 = pneg %p47
        %p357 = pneg %p44
        %p358 = pneg %p68
        %p359 = pneg %p65
        %p360 = pneg %p89
        %p361 = pneg %p86
        %p362 = pneg %p110
        %p363 = pneg %p107
        %p364 = pneg %p131
        %p365 = pneg %p128
        %p366 = pneg %p152
        %p367 = pneg %p149
        %p368 = pneg %p173
        %p369 = pneg %p170
        %p370 = pneg %p194
        %p371 = pneg %p191
        %p372 = pneg %p215
        %p373 = pneg %p212
        %p374 = pneg %p236
        %p375 = pneg %p233
        %p376 = pneg %p262
        %p377 = pneg %p259
        %s378 = sand.u32 %s249, 1
        %s379 = scalar_lea.sflag [#allocation6], %s378
        %s380 = sand.u32 %s249, 1
        %s381 = smul.addr %s380, 16
        %s382 = scalar_lea.vmem [#allocation9], %s381
        %p383 = scmp.lt.s32.totalorder %s26, 1
        %s384 = scalar_select %p383, %s26, 1
        %s385 = smul.addr %s384, 2
        %s386 = smul.addr %s385, 8
        %s387 = scalar_lea.vmem %s0, %s386
        %v388 = vld [vmem:[%s387] sm:$0xff]
        %v389 = vld [vmem:[%s387 + $0x8] sm:$0xff]
        %390 = vst [vmem:[#allocation2] sm:$0x1] 0.0
        %391 = vst [vmem:[#allocation2 + $0x11] sm:$0x1] 0.0
        %392 = vst [vmem:[#allocation2 + $0x1] sm:$0xff] %v388
        %393 = vst [vmem:[#allocation2 + $0x9] sm:$0xff] %v389
        %v394 = vld [vmem:[#allocation2] sm:$0xff]
        %v395 = vld [vmem:[#allocation2 + $0x8] sm:$0xff]
        %v396 = vld [vmem:[#allocation4] sm:$0xff]
        %v397 = vld [vmem:[#allocation4 + $0x8] sm:$0xff]
        %v398 = vld [vmem:[#allocation4 + $0x10] sm:$0xff]
        %v399 = vld [vmem:[#allocation4 + $0x18] sm:$0xff]
        %v400 = vld [vmem:[#allocation4 + $0x20] sm:$0xff]
        %v401 = vld [vmem:[#allocation4 + $0x28] sm:$0xff]
        %v402 = vld [vmem:[#allocation4 + $0x30] sm:$0xff]
        %v403 = vld [vmem:[#allocation4 + $0x38] sm:$0xff]
        %v404 = vld [vmem:[#allocation4 + $0x40] sm:$0xff]
        %v405 = vld [vmem:[#allocation4 + $0x48] sm:$0xff]
        %v406 = vld [vmem:[#allocation4 + $0x50] sm:$0xff]
        %v407 = vld [vmem:[#allocation4 + $0x58] sm:$0xff]
        %v408 = vld [vmem:[#allocation4 + $0x60] sm:$0xff]
        %v409 = vld [vmem:[#allocation4 + $0x68] sm:$0xff]
        %v410 = vld [vmem:[#allocation4 + $0x70] sm:$0xff]
        %v411 = vld [vmem:[#allocation4 + $0x78] sm:$0xff]
        %v412 = vld [vmem:[#allocation2 + $0x1] sm:$0xff]
        %v413 = vld [vmem:[#allocation2 + $0x9] sm:$0xff]
        %s414 = scalar_lea.vmem [#allocation4], 128
        %v415 = vld [vmem:[%s414] sm:$0xff]
        %v416 = vld [vmem:[%s414 + $0x8] sm:$0xff]
        %v417 = vld [vmem:[%s414 + $0x10] sm:$0xff]
        %v418 = vld [vmem:[%s414 + $0x18] sm:$0xff]
        %v419 = vld [vmem:[%s414 + $0x20] sm:$0xff]
        %v420 = vld [vmem:[%s414 + $0x28] sm:$0xff]
        %v421 = vld [vmem:[%s414 + $0x30] sm:$0xff]
        %v422 = vld [vmem:[%s414 + $0x38] sm:$0xff]
        %v423 = vld [vmem:[%s414 + $0x40] sm:$0xff]
        %v424 = vld [vmem:[%s414 + $0x48] sm:$0xff]
        %v425 = vld [vmem:[%s414 + $0x50] sm:$0xff]
        %v426 = vld [vmem:[%s414 + $0x58] sm:$0xff]
        %v427 = vld [vmem:[%s414 + $0x60] sm:$0xff]
        %v428 = vld [vmem:[%s414 + $0x68] sm:$0xff]
        %v429 = vld [vmem:[%s414 + $0x70] sm:$0xff]
        %v430 = vld [vmem:[%s414 + $0x78] sm:$0xff]
        %431 = vmatprep.subr.mxu0 0.0
        %432 = vmatpush1.msra.mxu0 %v415
        %433 = vmatprep.subr.mxu0 0.0
        %434 = vmatpush1.msra.mxu0 %v416
        %435 = vmatprep.subr.mxu0 0.0
        %436 = vmatpush1.msra.mxu0 %v417
        %437 = vmatprep.subr.mxu0 0.0
        %438 = vmatpush1.msra.mxu0 %v418
        %439 = vmatprep.subr.mxu0 0.0
        %440 = vmatpush1.msra.mxu0 %v419
        %441 = vmatprep.subr.mxu0 0.0
        %442 = vmatpush1.msra.mxu0 %v420
        %443 = vmatprep.subr.mxu0 0.0
        %444 = vmatpush1.msra.mxu0 %v421
        %445 = vmatprep.subr.mxu0 0.0
        %446 = vmatpush1.msra.mxu0 %v422
        %447 = vmatprep.subr.mxu0 0.0
        %448 = vmatpush1.msra.mxu0 %v423
        %449 = vmatprep.subr.mxu0 0.0
        %450 = vmatpush1.msra.mxu0 %v424
        %451 = vmatprep.subr.mxu0 0.0
        %452 = vmatpush1.msra.mxu0 %v425
        %453 = vmatprep.subr.mxu0 0.0
        %454 = vmatpush1.msra.mxu0 %v426
        %455 = vmatprep.subr.mxu0 0.0
        %456 = vmatpush1.msra.mxu0 %v427
        %457 = vmatprep.subr.mxu0 0.0
        %458 = vmatpush1.msra.mxu0 %v428
        %459 = vmatprep.subr.mxu0 0.0
        %460 = vmatpush1.msra.mxu0 %v429
        %461 = vmatprep.subr.mxu0 0.0
        %462 = vmatpush1.msra.mxu0 %v430
        %463 = vmatprep.subr.mxu0 0.0
        %464 = vmatpush1.msra.mxu0 0.0
        %465 = vmatprep.subr.mxu0 0.0
        %466 = vmatpush1.msra.mxu0 0.0
        %467 = vmatprep.subr.mxu0 0.0
        %468 = vmatpush1.msra.mxu0 0.0
        %469 = vmatprep.subr.mxu0 0.0
        %470 = vmatpush1.msra.mxu0 0.0
        %471 = vmatprep.subr.mxu0 0.0
        %472 = vmatpush1.msra.mxu0 0.0
        %473 = vmatprep.subr.mxu0 0.0
        %474 = vmatpush1.msra.mxu0 0.0
        %475 = vmatprep.subr.mxu0 0.0
        %476 = vmatpush1.msra.mxu0 0.0
        %477 = vmatprep.subr.mxu0 0.0
        %478 = vmatpush1.msra.mxu0 0.0
        %479 = vmatprep.subr.mxu0 0.0
        %480 = vmatpush1.msra.mxu0 0.0
        %481 = vmatprep.subr.mxu0 0.0
        %482 = vmatpush1.msra.mxu0 0.0
        %483 = vmatprep.subr.mxu0 0.0
        %484 = vmatpush1.msra.mxu0 0.0
        %485 = vmatprep.subr.mxu0 0.0
        %486 = vmatpush1.msra.mxu0 0.0
        %487 = vmatprep.subr.mxu0 0.0
        %488 = vmatpush1.msra.mxu0 0.0
        %489 = vmatprep.subr.mxu0 0.0
        %490 = vmatpush1.msra.mxu0 0.0
        %491 = vmatprep.subr.mxu0 0.0
        %492 = vmatpush1.msra.mxu0 0.0
        %493 = vmatprep.subr.mxu0 0.0
        %494 = vmatpush1.msra.mxu0 0.0
        %495 = vmatprep.mubr.f32.mxu0 0.0
        %496 = vmatmul.mubr.f32.gmra.mrb[0].mxu0 %v412
        %v497 = vpop.f32.mrb[0].mxu0
        %v498 = vadd.f32 0.0, %v497
        %v499 = vpop.f32.mrb[0].mxu0
        %500 = vmatprep.mubr.f32.mxu0 0.0
        %501 = vmatmul.mubr.f32.gmra.mrb[0].mxu0 %v413
        %v502 = vpop.f32.mrb[0].mxu0
        %v503 = vadd.f32 0.0, %v502
        %v504 = vpop.f32.mrb[0].mxu0
        %505 = vdwg.mxu0
        %506 = vmatprep.subr.mxu0 0.0
        %507 = vmatpush1.msra.mxu0 %v396
        %508 = vmatprep.subr.mxu0 0.0
        %509 = vmatpush1.msra.mxu0 %v397
        %510 = vmatprep.subr.mxu0 0.0
        %511 = vmatpush1.msra.mxu0 %v398
        %512 = vmatprep.subr.mxu0 0.0
        %513 = vmatpush1.msra.mxu0 %v399
        %514 = vmatprep.subr.mxu0 0.0
        %515 = vmatpush1.msra.mxu0 %v400
        %516 = vmatprep.subr.mxu0 0.0
        %517 = vmatpush1.msra.mxu0 %v401
        %518 = vmatprep.subr.mxu0 0.0
        %519 = vmatpush1.msra.mxu0 %v402
        %520 = vmatprep.subr.mxu0 0.0
        %521 = vmatpush1.msra.mxu0 %v403
        %522 = vmatprep.subr.mxu0 0.0
        %523 = vmatpush1.msra.mxu0 %v404
        %524 = vmatprep.subr.mxu0 0.0
        %525 = vmatpush1.msra.mxu0 %v405
        %526 = vmatprep.subr.mxu0 0.0
        %527 = vmatpush1.msra.mxu0 %v406
        %528 = vmatprep.subr.mxu0 0.0
        %529 = vmatpush1.msra.mxu0 %v407
        %530 = vmatprep.subr.mxu0 0.0
        %531 = vmatpush1.msra.mxu0 %v408
        %532 = vmatprep.subr.mxu0 0.0
        %533 = vmatpush1.msra.mxu0 %v409
        %534 = vmatprep.subr.mxu0 0.0
        %535 = vmatpush1.msra.mxu0 %v410
        %536 = vmatprep.subr.mxu0 0.0
        %537 = vmatpush1.msra.mxu0 %v411
        %538 = vmatprep.subr.mxu0 0.0
        %539 = vmatpush1.msra.mxu0 0.0
        %540 = vmatprep.subr.mxu0 0.0
        %541 = vmatpush1.msra.mxu0 0.0
        %542 = vmatprep.subr.mxu0 0.0
        %543 = vmatpush1.msra.mxu0 0.0
        %544 = vmatprep.subr.mxu0 0.0
        %545 = vmatpush1.msra.mxu0 0.0
        %546 = vmatprep.subr.mxu0 0.0
        %547 = vmatpush1.msra.mxu0 0.0
        %548 = vmatprep.subr.mxu0 0.0
        %549 = vmatpush1.msra.mxu0 0.0
        %550 = vmatprep.subr.mxu0 0.0
        %551 = vmatpush1.msra.mxu0 0.0
        %552 = vmatprep.subr.mxu0 0.0
        %553 = vmatpush1.msra.mxu0 0.0
        %554 = vmatprep.subr.mxu0 0.0
        %555 = vmatpush1.msra.mxu0 0.0
        %556 = vmatprep.subr.mxu0 0.0
        %557 = vmatpush1.msra.mxu0 0.0
        %558 = vmatprep.subr.mxu0 0.0
        %559 = vmatpush1.msra.mxu0 0.0
        %560 = vmatprep.subr.mxu0 0.0
        %561 = vmatpush1.msra.mxu0 0.0
        %562 = vmatprep.subr.mxu0 0.0
        %563 = vmatpush1.msra.mxu0 0.0
        %564 = vmatprep.subr.mxu0 0.0
        %565 = vmatpush1.msra.mxu0 0.0
        %566 = vmatprep.subr.mxu0 0.0
        %567 = vmatpush1.msra.mxu0 0.0
        %568 = vmatprep.subr.mxu0 0.0
        %569 = vmatpush1.msra.mxu0 0.0
        %570 = vmatprep.mubr.f32.mxu0 0.0
        %571 = vmatmul.mubr.f32.gmra.mrb[0].mxu0 %v394
        %v572 = vpop.f32.mrb[0].mxu0
        %v573 = vadd.f32 %v498, %v572
        %v574 = vpop.f32.mrb[0].mxu0
        %575 = vmatprep.mubr.f32.mxu0 0.0
        %576 = vmatmul.mubr.f32.gmra.mrb[0].mxu0 %v395
        %v577 = vpop.f32.mrb[0].mxu0
        %v578 = vadd.f32 %v503, %v577
        %v579 = vpop.f32.mrb[0].mxu0
        %580 = vdwg.mxu0
        %v581 = vld [vmem:[#allocation2 + $0x2] sm:$0xff]
        %v582 = vld [vmem:[#allocation2 + $0xa] sm:$0xff]
        %s583 = scalar_lea.vmem [#allocation4], 256
        %v584 = vld [vmem:[%s583] sm:$0xff]
        %v585 = vld [vmem:[%s583 + $0x8] sm:$0xff]
        %v586 = vld [vmem:[%s583 + $0x10] sm:$0xff]
        %v587 = vld [vmem:[%s583 + $0x18] sm:$0xff]
        %v588 = vld [vmem:[%s583 + $0x20] sm:$0xff]
        %v589 = vld [vmem:[%s583 + $0x28] sm:$0xff]
        %v590 = vld [vmem:[%s583 + $0x30] sm:$0xff]
        %v591 = vld [vmem:[%s583 + $0x38] sm:$0xff]
        %v592 = vld [vmem:[%s583 + $0x40] sm:$0xff]
        %v593 = vld [vmem:[%s583 + $0x48] sm:$0xff]
        %v594 = vld [vmem:[%s583 + $0x50] sm:$0xff]
        %v595 = vld [vmem:[%s583 + $0x58] sm:$0xff]
        %v596 = vld [vmem:[%s583 + $0x60] sm:$0xff]
        %v597 = vld [vmem:[%s583 + $0x68] sm:$0xff]
        %v598 = vld [vmem:[%s583 + $0x70] sm:$0xff]
        %v599 = vld [vmem:[%s583 + $0x78] sm:$0xff]
        %600 = vmatprep.subr.mxu0 0.0
        %601 = vmatpush1.msra.mxu0 %v584
        %602 = vmatprep.subr.mxu0 0.0
        %603 = vmatpush1.msra.mxu0 %v585
        %604 = vmatprep.subr.mxu0 0.0
        %605 = vmatpush1.msra.mxu0 %v586
        %606 = vmatprep.subr.mxu0 0.0
        %607 = vmatpush1.msra.mxu0 %v587
        %608 = vmatprep.subr.mxu0 0.0
        %609 = vmatpush1.msra.mxu0 %v588
        %610 = vmatprep.subr.mxu0 0.0
        %611 = vmatpush1.msra.mxu0 %v589
        %612 = vmatprep.subr.mxu0 0.0
        %613 = vmatpush1.msra.mxu0 %v590
        %614 = vmatprep.subr.mxu0 0.0
        %615 = vmatpush1.msra.mxu0 %v591
        %616 = vmatprep.subr.mxu0 0.0
        %617 = vmatpush1.msra.mxu0 %v592
        %618 = vmatprep.subr.mxu0 0.0
        %619 = vmatpush1.msra.mxu0 %v593
        %620 = vmatprep.subr.mxu0 0.0
        %621 = vmatpush1.msra.mxu0 %v594
        %622 = vmatprep.subr.mxu0 0.0
        %623 = vmatpush1.msra.mxu0 %v595
        %624 = vmatprep.subr.mxu0 0.0
        %625 = vmatpush1.msra.mxu0 %v596
        %626 = vmatprep.subr.mxu0 0.0
        %627 = vmatpush1.msra.mxu0 %v597
        %628 = vmatprep.subr.mxu0 0.0
        %629 = vmatpush1.msra.mxu0 %v598
        %630 = vmatprep.subr.mxu0 0.0
        %631 = vmatpush1.msra.mxu0 %v599
        %632 = vmatprep.subr.mxu0 0.0
        %633 = vmatpush1.msra.mxu0 0.0
        %634 = vmatprep.subr.mxu0 0.0
        %635 = vmatpush1.msra.mxu0 0.0
        %636 = vmatprep.subr.mxu0 0.0
        %637 = vmatpush1.msra.mxu0 0.0
        %638 = vmatprep.subr.mxu0 0.0
        %639 = vmatpush1.msra.mxu0 0.0
        %640 = vmatprep.subr.mxu0 0.0
        %641 = vmatpush1.msra.mxu0 0.0
        %642 = vmatprep.subr.mxu0 0.0
        %643 = vmatpush1.msra.mxu0 0.0
        %644 = vmatprep.subr.mxu0 0.0
        %645 = vmatpush1.msra.mxu0 0.0
        %646 = vmatprep.subr.mxu0 0.0
        %647 = vmatpush1.msra.mxu0 0.0
        %648 = vmatprep.subr.mxu0 0.0
        %649 = vmatpush1.msra.mxu0 0.0
        %650 = vmatprep.subr.mxu0 0.0
        %651 = vmatpush1.msra.mxu0 0.0
        %652 = vmatprep.subr.mxu0 0.0
        %653 = vmatpush1.msra.mxu0 0.0
        %654 = vmatprep.subr.mxu0 0.0
        %655 = vmatpush1.msra.mxu0 0.0
        %656 = vmatprep.subr.mxu0 0.0
        %657 = vmatpush1.msra.mxu0 0.0
        %658 = vmatprep.subr.mxu0 0.0
        %659 = vmatpush1.msra.mxu0 0.0
        %660 = vmatprep.subr.mxu0 0.0
        %661 = vmatpush1.msra.mxu0 0.0
        %662 = vmatprep.subr.mxu0 0.0
        %663 = vmatpush1.msra.mxu0 0.0
        %664 = vmatprep.mubr.f32.mxu0 0.0
        %665 = vmatmul.mubr.f32.gmra.mrb[0].mxu0 %v581
        %v666 = vpop.f32.mrb[0].mxu0
        %v667 = vadd.f32 0.0, %v666
        %v668 = vpop.f32.mrb[0].mxu0
        %669 = vmatprep.mubr.f32.mxu0 0.0
        %670 = vmatmul.mubr.f32.gmra.mrb[0].mxu0 %v582
        %v671 = vpop.f32.mrb[0].mxu0
        %v672 = vadd.f32 0.0, %v671
        %v673 = vpop.f32.mrb[0].mxu0
        %674 = vdwg.mxu0
        %v675 = vadd.f32 %v573, %v667
        %v676 = vadd.f32 %v578, %v672
        %v677 = vld [vmem:[%s2] sm:$0x1]
        %v679 = vlaneseq
        %v680 = vshrl.u32 %v679, 7
        %v681 = vsub.s32 0, %v680
        %v682 = vrot.slane %v677, %v681
        %v684 = vadd.f32 %v675, %v682
        %v685 = vadd.f32 %v676, %v682
        %v686 = vmax.f32 %v684, 0.0
        %v687 = vmax.f32 %v685, 0.0
        %688 = vst [vmem:[#allocation3] sm:$0x1] 0.0
        %689 = vst [vmem:[#allocation3 + $0x11] sm:$0x1] 0.0
        %690 = vst [vmem:[#allocation3 + $0x1] sm:$0xff] %v686
        %691 = vst [vmem:[#allocation3 + $0x9] sm:$0xff] %v687
        %v692 = vld [vmem:[#allocation3] sm:$0xff]
        %v693 = vld [vmem:[#allocation3 + $0x8] sm:$0xff]
        %v694 = vld [vmem:[#allocation7] sm:$0xff]
        %v695 = vld [vmem:[#allocation7 + $0x8] sm:$0xff]
        %v696 = vld [vmem:[#allocation7 + $0x10] sm:$0xff]
        %v697 = vld [vmem:[#allocation7 + $0x18] sm:$0xff]
        %v698 = vld [vmem:[#allocation7 + $0x20] sm:$0xff]
        %v699 = vld [vmem:[#allocation7 + $0x28] sm:$0xff]
        %v700 = vld [vmem:[#allocation7 + $0x30] sm:$0xff]
        %v701 = vld [vmem:[#allocation7 + $0x38] sm:$0xff]
        %v702 = vld [vmem:[#allocation7 + $0x40] sm:$0xff]
        %v703 = vld [vmem:[#allocation7 + $0x48] sm:$0xff]
        %v704 = vld [vmem:[#allocation7 + $0x50] sm:$0xff]
        %v705 = vld [vmem:[#allocation7 + $0x58] sm:$0xff]
        %v706 = vld [vmem:[#allocation7 + $0x60] sm:$0xff]
        %v707 = vld [vmem:[#allocation7 + $0x68] sm:$0xff]
        %v708 = vld [vmem:[#allocation7 + $0x70] sm:$0xff]
        %v709 = vld [vmem:[#allocation7 + $0x78] sm:$0xff]
        %v710 = vld [vmem:[#allocation3 + $0x1] sm:$0xff]
        %v711 = vld [vmem:[#allocation3 + $0x9] sm:$0xff]
        %s712 = scalar_lea.vmem [#allocation7], 128
        %v713 = vld [vmem:[%s712] sm:$0xff]
        %v714 = vld [vmem:[%s712 + $0x8] sm:$0xff]
        %v715 = vld [vmem:[%s712 + $0x10] sm:$0xff]
        %v716 = vld [vmem:[%s712 + $0x18] sm:$0xff]
        %v717 = vld [vmem:[%s712 + $0x20] sm:$0xff]
        %v718 = vld [vmem:[%s712 + $0x28] sm:$0xff]
        %v719 = vld [vmem:[%s712 + $0x30] sm:$0xff]
        %v720 = vld [vmem:[%s712 + $0x38] sm:$0xff]
        %v721 = vld [vmem:[%s712 + $0x40] sm:$0xff]
        %v722 = vld [vmem:[%s712 + $0x48] sm:$0xff]
        %v723 = vld [vmem:[%s712 + $0x50] sm:$0xff]
        %v724 = vld [vmem:[%s712 + $0x58] sm:$0xff]
        %v725 = vld [vmem:[%s712 + $0x60] sm:$0xff]
        %v726 = vld [vmem:[%s712 + $0x68] sm:$0xff]
        %v727 = vld [vmem:[%s712 + $0x70] sm:$0xff]
        %v728 = vld [vmem:[%s712 + $0x78] sm:$0xff]
        %729 = vmatprep.subr.mxu0 0.0
        %730 = vmatpush1.msra.mxu0 %v713
        %731 = vmatprep.subr.mxu0 0.0
        %732 = vmatpush1.msra.mxu0 %v714
        %733 = vmatprep.subr.mxu0 0.0
        %734 = vmatpush1.msra.mxu0 %v715
        %735 = vmatprep.subr.mxu0 0.0
        %736 = vmatpush1.msra.mxu0 %v716
        %737 = vmatprep.subr.mxu0 0.0
        %738 = vmatpush1.msra.mxu0 %v717
        %739 = vmatprep.subr.mxu0 0.0
        %740 = vmatpush1.msra.mxu0 %v718
        %741 = vmatprep.subr.mxu0 0.0
        %742 = vmatpush1.msra.mxu0 %v719
        %743 = vmatprep.subr.mxu0 0.0
        %744 = vmatpush1.msra.mxu0 %v720
        %745 = vmatprep.subr.mxu0 0.0
        %746 = vmatpush1.msra.mxu0 %v721
        %747 = vmatprep.subr.mxu0 0.0
        %748 = vmatpush1.msra.mxu0 %v722
        %749 = vmatprep.subr.mxu0 0.0
        %750 = vmatpush1.msra.mxu0 %v723
        %751 = vmatprep.subr.mxu0 0.0
        %752 = vmatpush1.msra.mxu0 %v724
        %753 = vmatprep.subr.mxu0 0.0
        %754 = vmatpush1.msra.mxu0 %v725
        %755 = vmatprep.subr.mxu0 0.0
        %756 = vmatpush1.msra.mxu0 %v726
        %757 = vmatprep.subr.mxu0 0.0
        %758 = vmatpush1.msra.mxu0 %v727
        %759 = vmatprep.subr.mxu0 0.0
        %760 = vmatpush1.msra.mxu0 %v728
        %761 = vmatprep.subr.mxu0 0.0
        %762 = vmatpush1.msra.mxu0 0.0
        %763 = vmatprep.subr.mxu0 0.0
        %764 = vmatpush1.msra.mxu0 0.0
        %765 = vmatprep.subr.mxu0 0.0
        %766 = vmatpush1.msra.mxu0 0.0
        %767 = vmatprep.subr.mxu0 0.0
        %768 = vmatpush1.msra.mxu0 0.0
        %769 = vmatprep.subr.mxu0 0.0
        %770 = vmatpush1.msra.mxu0 0.0
        %771 = vmatprep.subr.mxu0 0.0
        %772 = vmatpush1.msra.mxu0 0.0
        %773 = vmatprep.subr.mxu0 0.0
        %774 = vmatpush1.msra.mxu0 0.0
        %775 = vmatprep.subr.mxu0 0.0
        %776 = vmatpush1.msra.mxu0 0.0
        %777 = vmatprep.subr.mxu0 0.0
        %778 = vmatpush1.msra.mxu0 0.0
        %779 = vmatprep.subr.mxu0 0.0
        %780 = vmatpush1.msra.mxu0 0.0
        %781 = vmatprep.subr.mxu0 0.0
        %782 = vmatpush1.msra.mxu0 0.0
        %783 = vmatprep.subr.mxu0 0.0
        %784 = vmatpush1.msra.mxu0 0.0
        %785 = vmatprep.subr.mxu0 0.0
        %786 = vmatpush1.msra.mxu0 0.0
        %787 = vmatprep.subr.mxu0 0.0
        %788 = vmatpush1.msra.mxu0 0.0
        %789 = vmatprep.subr.mxu0 0.0
        %790 = vmatpush1.msra.mxu0 0.0
        %791 = vmatprep.subr.mxu0 0.0
        %792 = vmatpush1.msra.mxu0 0.0
        %793 = vmatprep.mubr.f32.mxu0 0.0
        %794 = vmatmul.mubr.f32.gmra.mrb[0].mxu0 %v710
        %v795 = vpop.f32.mrb[0].mxu0
        %v796 = vadd.f32 0.0, %v795
        %v797 = vpop.f32.mrb[0].mxu0
        %798 = vmatprep.mubr.f32.mxu0 0.0
        %799 = vmatmul.mubr.f32.gmra.mrb[0].mxu0 %v711
        %v800 = vpop.f32.mrb[0].mxu0
        %v801 = vadd.f32 0.0, %v800
        %v802 = vpop.f32.mrb[0].mxu0
        %803 = vdwg.mxu0
        %804 = vmatprep.subr.mxu0 0.0
        %805 = vmatpush1.msra.mxu0 %v694
        %806 = vmatprep.subr.mxu0 0.0
        %807 = vmatpush1.msra.mxu0 %v695
        %808 = vmatprep.subr.mxu0 0.0
        %809 = vmatpush1.msra.mxu0 %v696
        %810 = vmatprep.subr.mxu0 0.0
        %811 = vmatpush1.msra.mxu0 %v697
        %812 = vmatprep.subr.mxu0 0.0
        %813 = vmatpush1.msra.mxu0 %v698
        %814 = vmatprep.subr.mxu0 0.0
        %815 = vmatpush1.msra.mxu0 %v699
        %816 = vmatprep.subr.mxu0 0.0
        %817 = vmatpush1.msra.mxu0 %v700
        %818 = vmatprep.subr.mxu0 0.0
        %819 = vmatpush1.msra.mxu0 %v701
        %820 = vmatprep.subr.mxu0 0.0
        %821 = vmatpush1.msra.mxu0 %v702
        %822 = vmatprep.subr.mxu0 0.0
        %823 = vmatpush1.msra.mxu0 %v703
        %824 = vmatprep.subr.mxu0 0.0
        %825 = vmatpush1.msra.mxu0 %v704
        %826 = vmatprep.subr.mxu0 0.0
        %827 = vmatpush1.msra.mxu0 %v705
        %828 = vmatprep.subr.mxu0 0.0
        %829 = vmatpush1.msra.mxu0 %v706
        %830 = vmatprep.subr.mxu0 0.0
        %831 = vmatpush1.msra.mxu0 %v707
        %832 = vmatprep.subr.mxu0 0.0
        %833 = vmatpush1.msra.mxu0 %v708
        %834 = vmatprep.subr.mxu0 0.0
        %835 = vmatpush1.msra.mxu0 %v709
        %836 = vmatprep.subr.mxu0 0.0
        %837 = vmatpush1.msra.mxu0 0.0
        %838 = vmatprep.subr.mxu0 0.0
        %839 = vmatpush1.msra.mxu0 0.0
        %840 = vmatprep.subr.mxu0 0.0
        %841 = vmatpush1.msra.mxu0 0.0
        %842 = vmatprep.subr.mxu0 0.0
        %843 = vmatpush1.msra.mxu0 0.0
        %844 = vmatprep.subr.mxu0 0.0
        %845 = vmatpush1.msra.mxu0 0.0
        %846 = vmatprep.subr.mxu0 0.0
        %847 = vmatpush1.msra.mxu0 0.0
        %848 = vmatprep.subr.mxu0 0.0
        %849 = vmatpush1.msra.mxu0 0.0
        %850 = vmatprep.subr.mxu0 0.0
        %851 = vmatpush1.msra.mxu0 0.0
        %852 = vmatprep.subr.mxu0 0.0
        %853 = vmatpush1.msra.mxu0 0.0
        %854 = vmatprep.subr.mxu0 0.0
        %855 = vmatpush1.msra.mxu0 0.0
        %856 = vmatprep.subr.mxu0 0.0
        %857 = vmatpush1.msra.mxu0 0.0
        %858 = vmatprep.subr.mxu0 0.0
        %859 = vmatpush1.msra.mxu0 0.0
        %860 = vmatprep.subr.mxu0 0.0
        %861 = vmatpush1.msra.mxu0 0.0
        %862 = vmatprep.subr.mxu0 0.0
        %863 = vmatpush1.msra.mxu0 0.0
        %864 = vmatprep.subr.mxu0 0.0
        %865 = vmatpush1.msra.mxu0 0.0
        %866 = vmatprep.subr.mxu0 0.0
        %867 = vmatpush1.msra.mxu0 0.0
        %868 = vmatprep.mubr.f32.mxu0 0.0
        %869 = vmatmul.mubr.f32.gmra.mrb[0].mxu0 %v692
        %v870 = vpop.f32.mrb[0].mxu0
        %v871 = vadd.f32 %v796, %v870
        %v872 = vpop.f32.mrb[0].mxu0
        %873 = vmatprep.mubr.f32.mxu0 0.0
        %874 = vmatmul.mubr.f32.gmra.mrb[0].mxu0 %v693
        %v875 = vpop.f32.mrb[0].mxu0
        %v876 = vadd.f32 %v801, %v875
        %v877 = vpop.f32.mrb[0].mxu0
        %878 = vdwg.mxu0
        %v879 = vld [vmem:[#allocation3 + $0x2] sm:$0xff]
        %v880 = vld [vmem:[#allocation3 + $0xa] sm:$0xff]
        %s881 = scalar_lea.vmem [#allocation7], 256
        %v882 = vld [vmem:[%s881] sm:$0xff]
        %v883 = vld [vmem:[%s881 + $0x8] sm:$0xff]
        %v884 = vld [vmem:[%s881 + $0x10] sm:$0xff]
        %v885 = vld [vmem:[%s881 + $0x18] sm:$0xff]
        %v886 = vld [vmem:[%s881 + $0x20] sm:$0xff]
        %v887 = vld [vmem:[%s881 + $0x28] sm:$0xff]
        %v888 = vld [vmem:[%s881 + $0x30] sm:$0xff]
        %v889 = vld [vmem:[%s881 + $0x38] sm:$0xff]
        %v890 = vld [vmem:[%s881 + $0x40] sm:$0xff]
        %v891 = vld [vmem:[%s881 + $0x48] sm:$0xff]
        %v892 = vld [vmem:[%s881 + $0x50] sm:$0xff]
        %v893 = vld [vmem:[%s881 + $0x58] sm:$0xff]
        %v894 = vld [vmem:[%s881 + $0x60] sm:$0xff]
        %v895 = vld [vmem:[%s881 + $0x68] sm:$0xff]
        %v896 = vld [vmem:[%s881 + $0x70] sm:$0xff]
        %v897 = vld [vmem:[%s881 + $0x78] sm:$0xff]
        %898 = vmatprep.subr.mxu0 0.0
        %899 = vmatpush1.msra.mxu0 %v882
        %900 = vmatprep.subr.mxu0 0.0
        %901 = vmatpush1.msra.mxu0 %v883
        %902 = vmatprep.subr.mxu0 0.0
        %903 = vmatpush1.msra.mxu0 %v884
        %904 = vmatprep.subr.mxu0 0.0
        %905 = vmatpush1.msra.mxu0 %v885
        %906 = vmatprep.subr.mxu0 0.0
        %907 = vmatpush1.msra.mxu0 %v886
        %908 = vmatprep.subr.mxu0 0.0
        %909 = vmatpush1.msra.mxu0 %v887
        %910 = vmatprep.subr.mxu0 0.0
        %911 = vmatpush1.msra.mxu0 %v888
        %912 = vmatprep.subr.mxu0 0.0
        %913 = vmatpush1.msra.mxu0 %v889
        %914 = vmatprep.subr.mxu0 0.0
        %915 = vmatpush1.msra.mxu0 %v890
        %916 = vmatprep.subr.mxu0 0.0
        %917 = vmatpush1.msra.mxu0 %v891
        %918 = vmatprep.subr.mxu0 0.0
        %919 = vmatpush1.msra.mxu0 %v892
        %920 = vmatprep.subr.mxu0 0.0
        %921 = vmatpush1.msra.mxu0 %v893
        %922 = vmatprep.subr.mxu0 0.0
        %923 = vmatpush1.msra.mxu0 %v894
        %924 = vmatprep.subr.mxu0 0.0
        %925 = vmatpush1.msra.mxu0 %v895
        %926 = vmatprep.subr.mxu0 0.0
        %927 = vmatpush1.msra.mxu0 %v896
        %928 = vmatprep.subr.mxu0 0.0
        %929 = vmatpush1.msra.mxu0 %v897
        %930 = vmatprep.subr.mxu0 0.0
        %931 = vmatpush1.msra.mxu0 0.0
        %932 = vmatprep.subr.mxu0 0.0
        %933 = vmatpush1.msra.mxu0 0.0
        %934 = vmatprep.subr.mxu0 0.0
        %935 = vmatpush1.msra.mxu0 0.0
        %936 = vmatprep.subr.mxu0 0.0
        %937 = vmatpush1.msra.mxu0 0.0
        %938 = vmatprep.subr.mxu0 0.0
        %939 = vmatpush1.msra.mxu0 0.0
        %940 = vmatprep.subr.mxu0 0.0
        %941 = vmatpush1.msra.mxu0 0.0
        %942 = vmatprep.subr.mxu0 0.0
        %943 = vmatpush1.msra.mxu0 0.0
        %944 = vmatprep.subr.mxu0 0.0
        %945 = vmatpush1.msra.mxu0 0.0
        %946 = vmatprep.subr.mxu0 0.0
        %947 = vmatpush1.msra.mxu0 0.0
        %948 = vmatprep.subr.mxu0 0.0
        %949 = vmatpush1.msra.mxu0 0.0
        %950 = vmatprep.subr.mxu0 0.0
        %951 = vmatpush1.msra.mxu0 0.0
        %952 = vmatprep.subr.mxu0 0.0
        %953 = vmatpush1.msra.mxu0 0.0
        %954 = vmatprep.subr.mxu0 0.0
        %955 = vmatpush1.msra.mxu0 0.0
        %956 = vmatprep.subr.mxu0 0.0
        %957 = vmatpush1.msra.mxu0 0.0
        %958 = vmatprep.subr.mxu0 0.0
        %959 = vmatpush1.msra.mxu0 0.0
        %960 = vmatprep.subr.mxu0 0.0
        %961 = vmatpush1.msra.mxu0 0.0
        %962 = vmatprep.mubr.f32.mxu0 0.0
        %963 = vmatmul.mubr.f32.gmra.mrb[0].mxu0 %v879
        %v964 = vpop.f32.mrb[0].mxu0
        %v965 = vadd.f32 0.0, %v964
        %v966 = vpop.f32.mrb[0].mxu0
        %967 = vmatprep.mubr.f32.mxu0 0.0
        %968 = vmatmul.mubr.f32.gmra.mrb[0].mxu0 %v880
        %v969 = vpop.f32.mrb[0].mxu0
        %v970 = vadd.f32 0.0, %v969
        %v971 = vpop.f32.mrb[0].mxu0
        %972 = vdwg.mxu0
        %v973 = vadd.f32 %v871, %v965
        %v974 = vadd.f32 %v876, %v970
        %v975 = vld [vmem:[%s4] sm:$0x1]
        %v977 = vlaneseq
        %v978 = vshrl.u32 %v977, 7
        %v979 = vsub.s32 0, %v978
        %v980 = vrot.slane %v975, %v979
        %v982 = vadd.f32 %v973, %v980
        %v983 = vadd.f32 %v974, %v980
        %v984 = vadd.f32 %v982, %v388
        %v985 = vadd.f32 %v983, %v389
        %v986 = vmax.f32 %v984, 0.0
        %v987 = vmax.f32 %v985, 0.0
        %v988 = vadd.f32 %v986, %v987
        %v989 = vrot.slane %v988, 4
        %v990 = vadd.f32 %v988, %v989
        %v991 = vrot.slane %v990, 2
        %v992 = vadd.f32 %v990, %v991
        %v993 = vrot.slane %v992, 1
        %v994 = vadd.f32 %v992, %v993
        %v995 = vld [vmem:[%s5] sm:$0xff]
        %v996 = vld [vmem:[%s5 + $0x8] sm:$0xff]
        %v997 = vld [vmem:[%s5 + $0x10] sm:$0xff]
        %v998 = vld [vmem:[%s5 + $0x18] sm:$0xff]
        %v999 = vld [vmem:[%s5 + $0x20] sm:$0xff]
        %v1000 = vld [vmem:[%s5 + $0x28] sm:$0xff]
        %v1001 = vld [vmem:[%s5 + $0x30] sm:$0xff]
        %v1002 = vld [vmem:[%s5 + $0x38] sm:$0xff]
        %v1003 = vld [vmem:[%s5 + $0x40] sm:$0xff]
        %v1004 = vld [vmem:[%s5 + $0x48] sm:$0xff]
        %v1005 = vld [vmem:[%s5 + $0x50] sm:$0xff]
        %v1006 = vld [vmem:[%s5 + $0x58] sm:$0xff]
        %v1007 = vld [vmem:[%s5 + $0x60] sm:$0xff]
        %v1008 = vld [vmem:[%s5 + $0x68] sm:$0xff]
        %v1009 = vld [vmem:[%s5 + $0x70] sm:$0xff]
        %v1010 = vld [vmem:[%s5 + $0x78] sm:$0xff]
        %1011 = vmatprep.subr.mxu0 0.0
        %1012 = vmatpush1.msra.mxu0 %v995
        %1013 = vmatprep.subr.mxu0 0.0
        %1014 = vmatpush1.msra.mxu0 %v996
        %1015 = vmatprep.subr.mxu0 0.0
        %1016 = vmatpush1.msra.mxu0 %v997
        %1017 = vmatprep.subr.mxu0 0.0
        %1018 = vmatpush1.msra.mxu0 %v998
        %1019 = vmatprep.subr.mxu0 0.0
        %1020 = vmatpush1.msra.mxu0 %v999
        %1021 = vmatprep.subr.mxu0 0.0
        %1022 = vmatpush1.msra.mxu0 %v1000
        %1023 = vmatprep.subr.mxu0 0.0
        %1024 = vmatpush1.msra.mxu0 %v1001
        %1025 = vmatprep.subr.mxu0 0.0
        %1026 = vmatpush1.msra.mxu0 %v1002
        %1027 = vmatprep.subr.mxu0 0.0
        %1028 = vmatpush1.msra.mxu0 %v1003
        %1029 = vmatprep.subr.mxu0 0.0
        %1030 = vmatpush1.msra.mxu0 %v1004
        %1031 = vmatprep.subr.mxu0 0.0
        %1032 = vmatpush1.msra.mxu0 %v1005
        %1033 = vmatprep.subr.mxu0 0.0
        %1034 = vmatpush1.msra.mxu0 %v1006
        %1035 = vmatprep.subr.mxu0 0.0
        %1036 = vmatpush1.msra.mxu0 %v1007
        %1037 = vmatprep.subr.mxu0 0.0
        %1038 = vmatpush1.msra.mxu0 %v1008
        %1039 = vmatprep.subr.mxu0 0.0
        %1040 = vmatpush1.msra.mxu0 %v1009
        %1041 = vmatprep.subr.mxu0 0.0
        %1042 = vmatpush1.msra.mxu0 %v1010
        %1043 = vmatprep.subr.mxu0 0.0
        %1044 = vmatpush1.msra.mxu0 0.0
        %1045 = vmatprep.subr.mxu0 0.0
        %1046 = vmatpush1.msra.mxu0 0.0
        %1047 = vmatprep.subr.mxu0 0.0
        %1048 = vmatpush1.msra.mxu0 0.0
        %1049 = vmatprep.subr.mxu0 0.0
        %1050 = vmatpush1.msra.mxu0 0.0
        %1051 = vmatprep.subr.mxu0 0.0
        %1052 = vmatpush1.msra.mxu0 0.0
        %1053 = vmatprep.subr.mxu0 0.0
        %1054 = vmatpush1.msra.mxu0 0.0
        %1055 = vmatprep.subr.mxu0 0.0
        %1056 = vmatpush1.msra.mxu0 0.0
        %1057 = vmatprep.subr.mxu0 0.0
        %1058 = vmatpush1.msra.mxu0 0.0
        %1059 = vmatprep.subr.mxu0 0.0
        %1060 = vmatpush1.msra.mxu0 0.0
        %1061 = vmatprep.subr.mxu0 0.0
        %1062 = vmatpush1.msra.mxu0 0.0
        %1063 = vmatprep.subr.mxu0 0.0
        %1064 = vmatpush1.msra.mxu0 0.0
        %1065 = vmatprep.subr.mxu0 0.0
        %1066 = vmatpush1.msra.mxu0 0.0
        %1067 = vmatprep.subr.mxu0 0.0
        %1068 = vmatpush1.msra.mxu0 0.0
        %1069 = vmatprep.subr.mxu0 0.0
        %1070 = vmatpush1.msra.mxu0 0.0
        %1071 = vmatprep.subr.mxu0 0.0
        %1072 = vmatpush1.msra.mxu0 0.0
        %1073 = vmatprep.subr.mxu0 0.0
        %1074 = vmatpush1.msra.mxu0 0.0
        %1075 = vmatprep.mubr.f32.mxu0 0.0
        %1076 = vmatmul.mubr.f32.gmra.mrb[0].mxu0 %v994
        %v1077 = vpop.f32.mrb[0].mxu0
        %v1078 = vadd.f32 0.0, %v1077
        %v1079 = vpop.f32.mrb[0].mxu0
        %1080 = vdwg.mxu0
        %v1081 = vmul.f32 %v1078, 0.00390625
        %v1082 = vld [vmem:[%s6] sm:$0xff]
        %v1083 = vld [vmem:[%s7] sm:$0x1]
        %vm1084 = vcmask 64512
        %v1086 = vsel %vm1084, %v1081, 0
        %1088 = vmatprep.subr.mxu0 0.0
        %1089 = vmatpush1.msra.mxu0 %v1082
        %1090 = vmatprep.subr.mxu0 0.0
        %1091 = vmatpush1.msra.mxu0 0.0
        %1092 = vmatprep.subr.mxu0 0.0
        %1093 = vmatpush1.msra.mxu0 0.0
        %1094 = vmatprep.subr.mxu0 0.0
        %1095 = vmatpush1.msra.mxu0 0.0
        %1096 = vmatprep.subr.mxu0 0.0
        %1097 = vmatpush1.msra.mxu0 0.0
        %1098 = vmatprep.subr.mxu0 0.0
        %1099 = vmatpush1.msra.mxu0 0.0
        %1100 = vmatprep.subr.mxu0 0.0
        %1101 = vmatpush1.msra.mxu0 0.0
        %1102 = vmatprep.subr.mxu0 0.0
        %1103 = vmatpush1.msra.mxu0 0.0
        %1104 = vmatprep.subr.mxu0 0.0
        %1105 = vmatpush1.msra.mxu0 0.0
        %1106 = vmatprep.subr.mxu0 0.0
        %1107 = vmatpush1.msra.mxu0 0.0
        %1108 = vmatprep.subr.mxu0 0.0
        %1109 = vmatpush1.msra.mxu0 0.0
        %1110 = vmatprep.subr.mxu0 0.0
        %1111 = vmatpush1.msra.mxu0 0.0
        %1112 = vmatprep.subr.mxu0 0.0
        %1113 = vmatpush1.msra.mxu0 0.0
        %1114 = vmatprep.subr.mxu0 0.0
        %1115 = vmatpush1.msra.mxu0 0.0
        %1116 = vmatprep.subr.mxu0 0.0
        %1117 = vmatpush1.msra.mxu0 0.0
        %1118 = vmatprep.subr.mxu0 0.0
        %1119 = vmatpush1.msra.mxu0 0.0
        %1120 = vmatprep.subr.mxu0 0.0
        %1121 = vmatpush1.msra.mxu0 0.0
        %1122 = vmatprep.subr.mxu0 0.0
        %1123 = vmatpush1.msra.mxu0 0.0
        %1124 = vmatprep.subr.mxu0 0.0
        %1125 = vmatpush1.msra.mxu0 0.0
        %1126 = vmatprep.subr.mxu0 0.0
        %1127 = vmatpush1.msra.mxu0 0.0
        %1128 = vmatprep.subr.mxu0 0.0
        %1129 = vmatpush1.msra.mxu0 0.0
        %1130 = vmatprep.subr.mxu0 0.0
        %1131 = vmatpush1.msra.mxu0 0.0
        %1132 = vmatprep.subr.mxu0 0.0
        %1133 = vmatpush1.msra.mxu0 0.0
        %1134 = vmatprep.subr.mxu0 0.0
        %1135 = vmatpush1.msra.mxu0 0.0
        %1136 = vmatprep.subr.mxu0 0.0
        %1137 = vmatpush1.msra.mxu0 0.0
        %1138 = vmatprep.subr.mxu0 0.0
        %1139 = vmatpush1.msra.mxu0 0.0
        %1140 = vmatprep.subr.mxu0 0.0
        %1141 = vmatpush1.msra.mxu0 0.0
        %1142 = vmatprep.subr.mxu0 0.0
        %1143 = vmatpush1.msra.mxu0 0.0
        %1144 = vmatprep.subr.mxu0 0.0
        %1145 = vmatpush1.msra.mxu0 0.0
        %1146 = vmatprep.subr.mxu0 0.0
        %1147 = vmatpush1.msra.mxu0 0.0
        %1148 = vmatprep.subr.mxu0 0.0
        %1149 = vmatpush1.msra.mxu0 0.0
        %1150 = vmatprep.subr.mxu0 0.0
        %1151 = vmatpush1.msra.mxu0 0.0
        %1152 = vmatprep.mubr.f32.mxu0 0.0
        %1153 = vmatmul.mubr.f32.gmra.mrb[0].mxu0 %v1086
        %v1154 = vpop.f32.mrb[0].mxu0
        %v1155 = vadd.f32 %v1083, %v1154
        %v1156 = vpop.f32.mrb[0].mxu0
        %1157 = vdwg.mxu0
        %v1158 = vmax.f32 %v1155, 0.0
        %v1159 = vld [vmem:[%s8] sm:$0xf]
        %v1160 = vld [vmem:[%s9] sm:$0x1]
        %vm1161 = vcmask 31744
        %v1163 = vsel %vm1161, %v1158, 0
        %vm1165 = vcmask 1043456
        %v1167 = vsel %vm1165, %v1159, 0
        %1169 = vmatprep.subr.mxu0 0.0
        %1170 = vmatpush1.msra.mxu0 %v1167
        %1171 = vmatprep.subr.mxu0 0.0
        %1172 = vmatpush1.msra.mxu0 0.0
        %1173 = vmatprep.subr.mxu0 0.0
        %1174 = vmatpush1.msra.mxu0 0.0
        %1175 = vmatprep.subr.mxu0 0.0
        %1176 = vmatpush1.msra.mxu0 0.0
        %1177 = vmatprep.subr.mxu0 0.0
        %1178 = vmatpush1.msra.mxu0 0.0
        %1179 = vmatprep.subr.mxu0 0.0
        %1180 = vmatpush1.msra.mxu0 0.0
        %1181 = vmatprep.subr.mxu0 0.0
        %1182 = vmatpush1.msra.mxu0 0.0
        %1183 = vmatprep.subr.mxu0 0.0
        %1184 = vmatpush1.msra.mxu0 0.0
        %1185 = vmatprep.subr.mxu0 0.0
        %1186 = vmatpush1.msra.mxu0 0.0
        %1187 = vmatprep.subr.mxu0 0.0
        %1188 = vmatpush1.msra.mxu0 0.0
        %1189 = vmatprep.subr.mxu0 0.0
        %1190 = vmatpush1.msra.mxu0 0.0
        %1191 = vmatprep.subr.mxu0 0.0
        %1192 = vmatpush1.msra.mxu0 0.0
        %1193 = vmatprep.subr.mxu0 0.0
        %1194 = vmatpush1.msra.mxu0 0.0
        %1195 = vmatprep.subr.mxu0 0.0
        %1196 = vmatpush1.msra.mxu0 0.0
        %1197 = vmatprep.subr.mxu0 0.0
        %1198 = vmatpush1.msra.mxu0 0.0
        %1199 = vmatprep.subr.mxu0 0.0
        %1200 = vmatpush1.msra.mxu0 0.0
        %1201 = vmatprep.subr.mxu0 0.0
        %1202 = vmatpush1.msra.mxu0 0.0
        %1203 = vmatprep.subr.mxu0 0.0
        %1204 = vmatpush1.msra.mxu0 0.0
        %1205 = vmatprep.subr.mxu0 0.0
        %1206 = vmatpush1.msra.mxu0 0.0
        %1207 = vmatprep.subr.mxu0 0.0
        %1208 = vmatpush1.msra.mxu0 0.0
        %1209 = vmatprep.subr.mxu0 0.0
        %1210 = vmatpush1.msra.mxu0 0.0
        %1211 = vmatprep.subr.mxu0 0.0
        %1212 = vmatpush1.msra.mxu0 0.0
        %1213 = vmatprep.subr.mxu0 0.0
        %1214 = vmatpush1.msra.mxu0 0.0
        %1215 = vmatprep.subr.mxu0 0.0
        %1216 = vmatpush1.msra.mxu0 0.0
        %1217 = vmatprep.subr.mxu0 0.0
        %1218 = vmatpush1.msra.mxu0 0.0
        %1219 = vmatprep.subr.mxu0 0.0
        %1220 = vmatpush1.msra.mxu0 0.0
        %1221 = vmatprep.subr.mxu0 0.0
        %1222 = vmatpush1.msra.mxu0 0.0
        %1223 = vmatprep.subr.mxu0 0.0
        %1224 = vmatpush1.msra.mxu0 0.0
        %1225 = vmatprep.subr.mxu0 0.0
        %1226 = vmatpush1.msra.mxu0 0.0
        %1227 = vmatprep.subr.mxu0 0.0
        %1228 = vmatpush1.msra.mxu0 0.0
        %1229 = vmatprep.subr.mxu0 0.0
        %1230 = vmatpush1.msra.mxu0 0.0
        %1231 = vmatprep.subr.mxu0 0.0
        %1232 = vmatpush1.msra.mxu0 0.0
        %1233 = vmatprep.mubr.f32.mxu0 0.0
        %1234 = vmatmul.mubr.f32.gmra.mrb[0].mxu0 %v1163
        %v1235 = vpop.f32.mrb[0].mxu0
        %v1236 = vadd.f32 %v1160, %v1235
        %v1237 = vpop.f32.mrb[0].mxu0
        %1238 = vdwg.mxu0
        %v1239 = vxor.u32 %v1236, 2147483648
        %v1240 = vmul.f32 %v1239, 1.442695
        %v1241 = vpow.pop %v1240
        %v1242 = vadd.f32 %v1241, 1.0
        %v1243 = vrcp.pop %v1242
        %v1244 = vmul.f32 1.0, %v1243
        %v1245 = vlaneseq
        %v1246 = vshrl.u32 %v1245, 7
        %v1247 = vsub.s32 0, %v1246
        %v1248 = vrot.slane %v1244, %v1247
        %v1249 = vmul.f32 %v986, %v1248
        %v1250 = vmul.f32 %v987, %v1248
        %v1251 = vadd.f32 %v1249, %v388
        %v1252 = vadd.f32 %v1250, %v389
        %1253 = vst [vmem:[%s382] sm:$0xff] %v1251
        %1254 = vst [vmem:[%s382 + $0x8] sm:$0xff] %v1252
        %s1255 = sand.u32 %s249, 1
        %s1256 = scalar_lea.sflag [#allocation6], %s1255
        %s1257 = sand.u32 %s249, 1
        %s1258 = smul.addr %s1257, 16
        %s1259 = scalar_lea.vmem [#allocation9], %s1258
        // Predicated region
        $region69: #{tpu_custom_call.1} parent=59 // pred_check
          %p1260 = pneg %p259
        $region70: #{tpu_custom_call.1} parent=59 // pred_check_branch
          %1262 = sbr.rel (%p1260) target = $region72
        $region71: #{tpu_custom_call.1} parent=59 // pred_region
          %s1264 = ssub.s32 256, 256
          %1265 = vsyncadd %s1256, %s1264
          %s1266 = smul.addr %s26, 2
          %s1267 = smul.addr %s1266, 128
          %s1268 = scalar_lea.hbm %s10, %s1267
          %s1269 = sshll.u32 %s1259, 4
          %s1270 = int_to_ptr.vmem [resolvable:$true] %s1269
          %1275 = dma.vmem_to_hbm [thread:$0]  %s1270, 256, %s1268, %s1256, 128, 128, 8
        $region72: #{tpu_custom_call.1} parent=59 // pred_fallthru
          _
      $region60: #{tpu_custom_call.1} parent=5 // pred_fallthru
        _
      %p1276 = scmp.le.s32.totalorder 2, %s21
      // Predicated region
      $region73: #{tpu_custom_call.1} parent=5 // pred_check
        %p1277 = pneg %p1276
      $region74: #{tpu_custom_call.1} parent=5 // pred_check_branch
        %1279 = sbr.rel (%p1277) target = $region76
      $region75: #{tpu_custom_call.1} parent=5 // pred_region
        %s1280 = ssub.s32 %s21, 2
        // Predicated region
        $region77: #{tpu_custom_call.1} parent=75 // pred_check
          %p1281 = pneg %p265
        $region78: #{tpu_custom_call.1} parent=75 // pred_check_branch
          %1283 = sbr.rel (%p1281) target = $region80
        $region79: #{tpu_custom_call.1} parent=75 // pred_region
          %s1284 = sand.u32 %s250, 1
          %s1285 = scalar_lea.sflag [#allocation6], %s1284
          %s1286 = sand.u32 %s250, 1
          %s1287 = smul.addr %s1286, 16
          %s1288 = scalar_lea.vmem [#allocation9], %s1287
          %1289 = dma.done %s1285, 256
        $region80: #{tpu_custom_call.1} parent=75 // pred_fallthru
          _
      $region76: #{tpu_custom_call.1} parent=5 // pred_fallthru
        _
    $region6: #{tpu_custom_call.1} parent=1 // loop_footer
      %s25 = sadd.s32 1, %s21
    $region7: #{tpu_custom_call.1} parent=1 // loop_footer_branch
      %20 = sbr.rel target = $region3
    $region8: #{tpu_custom_call.1} parent=1 // loop_exit
      _
    %1290 = vsyncpa [#allocation5], 1
    %s1291 = scalar_lea.sflag [#allocation5], 1
    %1292 = vsyncpa %s1291, 1
    %1293 = vsyncpa [#allocation8], 1
    %1294 = vsyncpa [#allocation6], 1
    %s1295 = scalar_lea.sflag [#allocation6], 1
    %1296 = vsyncpa %s1295, 1

</llo_original>
